<compile_context>
chip_gen: v7x
topology: tpu7x:2x2x1
jax: 0.10.0
libtpu: 0.0.40
codegen_flags: <defaults>
</compile_context>

<pallas_src>
import functools

import numpy as np
import jax
import jax.numpy as jnp
from jax import lax
from jax.experimental import pallas as pl
from jax.experimental.pallas import tpu as pltpu


# ---------------------------------------------------------------------------
# In-kernel helpers (all work on (C, flat_pixels) lane-dense values)
# ---------------------------------------------------------------------------
def _shift_up(f, s):
    """result[:, i] = f[:, i + s]  (tail columns are junk, only read masked)."""
    return jnp.concatenate([f[:, s:], f[:, -s:]], axis=1)


def _shift_down(f, s):
    """result[:, i] = f[:, i - s]  (head columns are junk, only read masked)."""
    return jnp.concatenate([f[:, :s], f[:, :-s]], axis=1)


def _embed_and_pad(o, row_id, col_id, H, W, P, dtype):
    """Turn a conv-stage output (C, H*Wp) into the next stage's padded-flat
    activation (C, Hp*Wp + 2P) with replicate margins of width P.

    o's column h*Wp + w holds output pixel (h, w) for w < W; columns with
    w >= W are junk and land exactly in the margin area, where they are
    overwritten by the shift+select passes below.
    """
    Wp, Hp = W + 2 * P, H + 2 * P
    C = o.shape[0]
    o = o.astype(dtype)
    filler = jnp.zeros((C, P * Wp + P), dtype)
    f = jnp.concatenate([filler, o, filler], axis=1)
    # Left / right replicate columns (innermost first: each pass copies an
    # already-correct neighbour one lane away).
    for j in range(P - 1, -1, -1):
        f = jnp.where(col_id == j, _shift_up(f, 1), f)
    for j in range(P + W, Wp):
        f = jnp.where(col_id == j, _shift_down(f, 1), f)
    # Top / bottom replicate rows (after columns so corners come out right).
    for j in range(P - 1, -1, -1):
        f = jnp.where(row_id == j, _shift_up(f, Wp), f)
    for j in range(P + H, Hp):
        f = jnp.where(row_id == j, _shift_down(f, Wp), f)
    return f


def _conv_stage(f, w_ref, K, d, H, W, P):
    """One grouped conv as a single im2col matmul.

    f:     (Cin, Hp*Wp + 2P) padded-flat activation (margin P >= this pad).
    w_ref: (Cout, K*K*Cin) block-diag dense weight, column = (ky*K+kx)*Cin+c.
    Returns (Cout, H*Wp) float32 (lane-dense over pixels).
    """
    Wp = W + 2 * P
    p = (K - 1) // 2 * d
    L = H * Wp
    taps = []
    for ky in range(K):
        for kx in range(K):
            off = (P - p + ky * d) * Wp + (P - p + kx * d)
            taps.append(f[:, off:off + L])
    patches = jnp.concatenate(taps, axis=0)                # (K*K*Cin, L)
    return jnp.dot(w_ref[...], patches, preferred_element_type=jnp.float32)


def _paconv_kernel(K, dil, n_pre, H, W, P, x_ref, rc_ref, *refs):
    """Whole PAConvGroup forward for one batch sample (one grid step)."""
    out_ref = refs[-1]
    w_refs = refs[:-1]
    cdt = w_refs[0].dtype                      # MXU operand dtype (bf16 / f32)

    rc = rc_ref[...]
    row_id = rc[0:1, :]                        # (1, total) int32
    col_id = rc[1:2, :]

    f = x_ref[0].astype(cdt)                   # (Cin, Hp*Wp + 2P), pre-padded
    i = 0
    for _ in range(n_pre):                     # conv0/1/2 + LeakyReLU (d = 1)
        o = _conv_stage(f, w_refs[i], K, 1, H, W, P)
        o = jnp.where(o >= 0.0, o, 0.01 * o)                 # nn.LeakyReLU()
        f = _embed_and_pad(o, row_id, col_id, H, W, P, cdt)
        i += 1

    x1 = _conv_stage(f, w_refs[i], K, dil, H, W, P); i += 1          # k1
    f1 = _embed_and_pad(x1, row_id, col_id, H, W, P, cdt)
    s = _conv_stage(f1, w_refs[i], K, dil, H, W, P); i += 1          # k2
    y = pl.reciprocal(1.0 + jnp.exp(-s), approx=True)                # sigmoid
    t = _conv_stage(f1, w_refs[i], K, dil, H, W, P); i += 1          # k3
    fz = _embed_and_pad(t * y, row_id, col_id, H, W, P, cdt)
    o = _conv_stage(fz, w_refs[i], K, dil, H, W, P)                  # k4
    out_ref[0] = o.astype(out_ref.dtype)


# ---------------------------------------------------------------------------
# Parameter setup (glue)
# ---------------------------------------------------------------------------
def _to_dense(w_oihw, groups, dtype):
    """(Cout, Cin/groups, K, K) grouped weight -> (Cout, K*K*Cin) block-diag.

    Column order is (ky*K + kx)*Cin + c to match the im2col tap stacking.
    Note: block-diag expansion wastes a factor `groups` of MXU work/VMEM; it
    is an acceptable trade for small nscale (here 2).  For large nscale the
    groups should be folded into the contraction instead.
    """
    Cout, cin_g, K, _ = w_oihw.shape
    cout_g = Cout // groups
    Cin = cin_g * groups
    dense = jnp.zeros((Cout, Cin, K, K), w_oihw.dtype)
    for g in range(groups):
        dense = dense.at[g * cout_g:(g + 1) * cout_g,
                         g * cin_g:(g + 1) * cin_g].set(
                             w_oihw[g * cout_g:(g + 1) * cout_g])
    dense = jnp.transpose(dense, (0, 2, 3, 1)).reshape(Cout, K * K * Cin)
    return dense.astype(dtype)


def _init_conv_weight(key, cout, cin_g, K):
    """Deterministic Kaiming-uniform-style init (same shape as nn.Conv2d)."""
    fan_in = cin_g * K * K
    bound = 1.0 / (fan_in ** 0.5)
    return jax.random.uniform(key, (cout, cin_g, K, K), jnp.float32,
                              -bound, bound)


class PAConvGroupPallas:
    """JAX/Pallas re-implementation of PAConvGroup's forward pass."""

    def __init__(self, nscale, nf, K=3, extract_features=False, opt=0,
                 compute_dtype=jnp.bfloat16, key=None):
        self.nscale = nscale
        self.nf = nf
        self.K = K
        self.extract_features = extract_features
        self.dilation = 2 if opt == 10 else 1
        self.C_out = nf * 2
        self.compute_dtype = compute_dtype

        key = jax.random.PRNGKey(0) if key is None else key
        keys = jax.random.split(key, 7)

        # (oihw_weight, groups, dilation) in application order; f32 originals
        # feed the pure-JAX reference, dense block-diag versions feed the
        # kernel (cast to compute_dtype for the MXU).
        self.oihw = []
        if extract_features:
            c0 = nscale * 2
            self.oihw.append((_init_conv_weight(keys[4], c0, 1, K), c0, 1))
            self.oihw.append((_init_conv_weight(keys[5], c0, 1, K), c0, 1))
            self.oihw.append((_init_conv_weight(keys[6], nf * 2, 1, K), c0, 1))
        cin_g = (nf * 2) // nscale
        for i in range(4):  # k1, k2, k3, k4
            self.oihw.append((_init_conv_weight(keys[i], nf * 2, cin_g, K),
                              nscale, self.dilation))

        self.dense = [_to_dense(w, g, compute_dtype) for (w, g, _) in self.oihw]
        # Uniform padded margin P = max pad over the fused stages.
        self.P = max((K - 1) // 2 * d for (_, _, d) in self.oihw)

    def __call__(self, x_nchw):
        N, Cin0, H, W = x_nchw.shape
        P = self.P
        Wp, Hp = W + 2 * P, H + 2 * P
        total = Hp * Wp + 2 * P          # flat padded length (+2P tap slack)
        L = H * Wp                       # per-stage output columns

        # Edge-pad the input once (XLA), flatten spatial dims (free reshape).
        xp = jnp.pad(x_nchw, ((0, 0), (0, 0), (P, P), (P, P)), mode='edge')
        xp = xp.reshape(N, Cin0, Hp * Wp)
        xp = jnp.pad(xp, ((0, 0), (0, 0), (0, 2 * P)))       # trailing slack

        # Precomputed row/column ids of the flat padded layout (avoids
        # in-kernel integer div/mod).
        idx = np.arange(total, dtype=np.int64)
        rc = jnp.asarray(np.stack([idx // Wp, idx % Wp]).astype(np.int32))

        n_pre = 3 if self.extract_features else 0
        kern = functools.partial(_paconv_kernel, self.K, self.dilation,
                                 n_pre, H, W, P)

        flops = 0
        for w in self.dense:
            co, ck = w.shape
            flops += 2 * N * co * ck * L
        bytes_accessed = (int(xp.size) * 4 + int(rc.size) * 4
                          + sum(int(w.size) * w.dtype.itemsize
                                for w in self.dense)
                          + N * self.C_out * L * 4)
        transcendentals = N * self.C_out * L                 # exp in sigmoid

        out = pl.pallas_call(
            kern,
            out_shape=jax.ShapeDtypeStruct((N, self.C_out, L), x_nchw.dtype),
            grid=(N,),
            in_specs=[pl.BlockSpec((1, Cin0, total), lambda n: (n, 0, 0)),
                      pl.BlockSpec((2, total), lambda n: (0, 0))]
                     + [pl.BlockSpec(w.shape, lambda n: (0, 0))
                        for w in self.dense],
            out_specs=pl.BlockSpec((1, self.C_out, L), lambda n: (n, 0, 0)),
            compiler_params=pltpu.CompilerParams(
                dimension_semantics=("parallel",),
                vmem_limit_bytes=48 * 1024 * 1024),
            cost_estimate=pl.CostEstimate(
                flops=int(flops),
                transcendentals=int(transcendentals),
                bytes_accessed=int(bytes_accessed)),
        )(xp, rc, *self.dense)

        # (N, Cout, H*Wp) -> (N, Cout, H, Wp) -> drop the junk columns.
        return out.reshape(N, self.C_out, H, Wp)[:, :, :, :W]


# ---------------------------------------------------------------------------
# Pure-JAX reference (for verification only)
# ---------------------------------------------------------------------------
def _ref_gconv(x_nchw, w_oihw, groups, dilation):
    K = w_oihw.shape[-1]
    p = (K - 1) // 2 * dilation
    xp = jnp.pad(x_nchw, ((0, 0), (0, 0), (p, p), (p, p)), mode='edge')
    return lax.conv_general_dilated(
        xp, w_oihw, window_strides=(1, 1), padding='VALID',
        rhs_dilation=(dilation, dilation),
        dimension_numbers=('NCHW', 'OIHW', 'NCHW'),
        feature_group_count=groups)


def ref_forward(mod, x):
    params = list(mod.oihw)
    if mod.extract_features:
        for (w, g, d) in params[:3]:
            x = _ref_gconv(x, w, g, d)
            x = jnp.where(x >= 0.0, x, 0.01 * x)
        params = params[3:]
    (w1, g, d), (w2, _, _), (w3, _, _), (w4, _, _) = params
    x1 = _ref_gconv(x, w1, g, d)
    y = jax.nn.sigmoid(_ref_gconv(x1, w2, g, d))
    z = _ref_gconv(x1, w3, g, d) * y
    return _ref_gconv(z, w4, g, d)


# ---------------------------------------------------------------------------
if __name__ == "__main__":
    key = jax.random.PRNGKey(0)
    kx, kw = jax.random.split(key)

    nscale, nf, N, H, W = 2, 8, 2, 16, 16            # nf*2 = 16 channels
    x = jax.random.normal(kx, (N, nf * 2, H, W), jnp.float32)

    def check(name, mod, xin, tol):
        out = jax.block_until_ready(mod(xin))
        ref = jax.block_until_ready(ref_forward(mod, xin))
        assert out.shape == ref.shape == (xin.shape[0], nf * 2, H, W)
        err = float(jnp.max(jnp.abs(out - ref)))
        if not (err < tol):
            raise SystemExit(f"{name}: Pallas/reference mismatch, "
                             f"max abs err = {err} (tol {tol})")

    # 1) Strict check of the algorithm in f32 (exp + approx-reciprocal sigmoid).
    check("f32 opt=0",
          PAConvGroupPallas(nscale, nf, K=3, extract_features=False, opt=0,
                            compute_dtype=jnp.float32, key=kw), x, 5e-3)
    # 2) bf16 MXU operands (perf config for v6e/v7x), f32 accumulation.
    check("bf16 opt=0",
          PAConvGroupPallas(nscale, nf, K=3, extract_features=False, opt=0,
                            compute_dtype=jnp.bfloat16, key=kw), x, 8e-2)
    # 3) Dilated variant (opt=10 -> dilation 2, replicate pad 2).
    check("f32 opt=10",
          PAConvGroupPallas(nscale, nf, K=3, extract_features=False, opt=10,
                            compute_dtype=jnp.float32, key=kw), x, 5e-3)
    # 4) extract_features=True branch (conv0/conv1/conv2 + LeakyReLU prelude).
    xe = jax.random.normal(kx, (N, nscale * 2, H, W), jnp.float32)
    check("f32 extract_features",
          PAConvGroupPallas(nscale, nf, K=3, extract_features=True, opt=0,
                            compute_dtype=jnp.float32, key=kw), xe, 5e-3)

    print("KERNEL_OK")
</pallas_src>

<mosaic_0001>
module attributes {stable_mosaic.version = 11 : i64} {
  func.func @_paconv_kernel(%arg0: i32, %arg1: memref<1x16x326xf32, #tpu.memory_space<vmem>>, %arg2: memref<2x326xi32, #tpu.memory_space<vmem>>, %arg3: memref<16x144xf32, #tpu.memory_space<vmem>>, %arg4: memref<16x144xf32, #tpu.memory_space<vmem>>, %arg5: memref<16x144xf32, #tpu.memory_space<vmem>>, %arg6: memref<16x144xf32, #tpu.memory_space<vmem>>, %arg7: memref<1x16x288xf32, #tpu.memory_space<vmem>>) attributes {dimension_semantics = [#tpu.dimension_semantics<parallel>], iteration_bounds = array<i64: 2>, scalar_prefetch = 0 : i64, scratch_operands = 0 : i64, tpu.core_type = #tpu.core_type<tc>, window_params = [{transform_indices = @transform_0, window_bounds = array<i64: 1, 16, 326>}, {pipeline_mode = #tpu.pipeline_mode<synchronous>, transform_indices = @transform_1, window_bounds = array<i64: 2, 326>}, {pipeline_mode = #tpu.pipeline_mode<synchronous>, transform_indices = @transform_2, window_bounds = array<i64: 16, 144>}, {pipeline_mode = #tpu.pipeline_mode<synchronous>, transform_indices = @transform_3, window_bounds = array<i64: 16, 144>}, {pipeline_mode = #tpu.pipeline_mode<synchronous>, transform_indices = @transform_4, window_bounds = array<i64: 16, 144>}, {pipeline_mode = #tpu.pipeline_mode<synchronous>, transform_indices = @transform_5, window_bounds = array<i64: 16, 144>}, {transform_indices = @transform_6, window_bounds = array<i64: 1, 16, 288>}]} {
    %c0 = arith.constant 0 : index
    %c0_0 = arith.constant 0 : index
    %0 = vector.load %arg2[%c0, %c0_0] : memref<2x326xi32, #tpu.memory_space<vmem>>, vector<2x326xi32>
    %1 = vector.extract_strided_slice %0 {offsets = [0, 0], sizes = [1, 326], strides = [1, 1]} : vector<2x326xi32> to vector<1x326xi32>
    %2 = vector.extract_strided_slice %0 {offsets = [1, 0], sizes = [1, 326], strides = [1, 1]} : vector<2x326xi32> to vector<1x326xi32>
    %c0_1 = arith.constant 0 : index
    %c0_2 = arith.constant 0 : index
    %c0_3 = arith.constant 0 : index
    %3 = vector.load %arg1[%c0_1, %c0_2, %c0_3] : memref<1x16x326xf32, #tpu.memory_space<vmem>>, vector<1x16x326xf32>
    %4 = vector.shape_cast %3 : vector<1x16x326xf32> to vector<16x326xf32>
    %5 = vector.extract_strided_slice %4 {offsets = [0, 0], sizes = [16, 288], strides = [1, 1]} : vector<16x326xf32> to vector<16x288xf32>
    %6 = vector.extract_strided_slice %4 {offsets = [0, 1], sizes = [16, 288], strides = [1, 1]} : vector<16x326xf32> to vector<16x288xf32>
    %7 = vector.extract_strided_slice %4 {offsets = [0, 2], sizes = [16, 288], strides = [1, 1]} : vector<16x326xf32> to vector<16x288xf32>
    %8 = vector.extract_strided_slice %4 {offsets = [0, 18], sizes = [16, 288], strides = [1, 1]} : vector<16x326xf32> to vector<16x288xf32>
    %9 = vector.extract_strided_slice %4 {offsets = [0, 19], sizes = [16, 288], strides = [1, 1]} : vector<16x326xf32> to vector<16x288xf32>
    %10 = vector.extract_strided_slice %4 {offsets = [0, 20], sizes = [16, 288], strides = [1, 1]} : vector<16x326xf32> to vector<16x288xf32>
    %11 = vector.extract_strided_slice %4 {offsets = [0, 36], sizes = [16, 288], strides = [1, 1]} : vector<16x326xf32> to vector<16x288xf32>
    %12 = vector.extract_strided_slice %4 {offsets = [0, 37], sizes = [16, 288], strides = [1, 1]} : vector<16x326xf32> to vector<16x288xf32>
    %13 = vector.extract_strided_slice %4 {offsets = [0, 38], sizes = [16, 288], strides = [1, 1]} : vector<16x326xf32> to vector<16x288xf32>
    %14 = tpu.concatenate %5, %6, %7, %8, %9, %10, %11, %12, %13 in 0 : vector<16x288xf32>, vector<16x288xf32>, vector<16x288xf32>, vector<16x288xf32>, vector<16x288xf32>, vector<16x288xf32>, vector<16x288xf32>, vector<16x288xf32>, vector<16x288xf32> -> vector<144x288xf32>
    %c0_4 = arith.constant 0 : index
    %c0_5 = arith.constant 0 : index
    %15 = vector.load %arg3[%c0_4, %c0_5] : memref<16x144xf32, #tpu.memory_space<vmem>>, vector<16x144xf32>
    %cst = arith.constant dense<0.000000e+00> : vector<16x288xf32>
    %16 = tpu.matmul %15, %14, %cst {dimension_numbers = #tpu.dot_dimension_numbers<[1], [0], [0], [1], [0, 0, 1, 1], [], []>} : vector<16x144xf32>, vector<144x288xf32>, vector<16x288xf32> -> vector<16x288xf32>
    %cst_6 = arith.constant 0.000000e+00 : f32
    %17 = vector.broadcast %cst_6 : f32 to vector<16x19xf32>
    %18 = tpu.concatenate %17, %16, %17 in 1 : vector<16x19xf32>, vector<16x288xf32>, vector<16x19xf32> -> vector<16x326xf32>
    %c0_i32 = arith.constant 0 : i32
    %19 = vector.broadcast %c0_i32 : i32 to vector<1x326xi32>
    %20 = arith.cmpi eq, %2, %19 : vector<1x326xi32>
    %21 = vector.extract_strided_slice %18 {offsets = [0, 1], sizes = [16, 325], strides = [1, 1]} : vector<16x326xf32> to vector<16x325xf32>
    %22 = vector.extract_strided_slice %18 {offsets = [0, 325], sizes = [16, 1], strides = [1, 1]} : vector<16x326xf32> to vector<16x1xf32>
    %23 = tpu.concatenate %21, %22 in 1 : vector<16x325xf32>, vector<16x1xf32> -> vector<16x326xf32>
    %24 = vector.shape_cast %20 : vector<1x326xi1> to vector<1x326xi1>
    %25 = vector.broadcast %24 : vector<1x326xi1> to vector<16x326xi1>
    %26 = arith.select %25, %23, %18 : vector<16x326xi1>, vector<16x326xf32>
    %c17_i32 = arith.constant 17 : i32
    %27 = vector.broadcast %c17_i32 : i32 to vector<1x326xi32>
    %28 = arith.cmpi eq, %2, %27 : vector<1x326xi32>
    %29 = vector.extract_strided_slice %26 {offsets = [0, 0], sizes = [16, 1], strides = [1, 1]} : vector<16x326xf32> to vector<16x1xf32>
    %30 = vector.extract_strided_slice %26 {offsets = [0, 0], sizes = [16, 325], strides = [1, 1]} : vector<16x326xf32> to vector<16x325xf32>
    %31 = tpu.concatenate %29, %30 in 1 : vector<16x1xf32>, vector<16x325xf32> -> vector<16x326xf32>
    %32 = vector.shape_cast %28 : vector<1x326xi1> to vector<1x326xi1>
    %33 = vector.broadcast %32 : vector<1x326xi1> to vector<16x326xi1>
    %34 = arith.select %33, %31, %26 : vector<16x326xi1>, vector<16x326xf32>
    %c0_i32_7 = arith.constant 0 : i32
    %35 = vector.broadcast %c0_i32_7 : i32 to vector<1x326xi32>
    %36 = arith.cmpi eq, %1, %35 : vector<1x326xi32>
    %37 = vector.extract_strided_slice %34 {offsets = [0, 18], sizes = [16, 308], strides = [1, 1]} : vector<16x326xf32> to vector<16x308xf32>
    %38 = vector.extract_strided_slice %34 {offsets = [0, 308], sizes = [16, 18], strides = [1, 1]} : vector<16x326xf32> to vector<16x18xf32>
    %39 = tpu.concatenate %37, %38 in 1 : vector<16x308xf32>, vector<16x18xf32> -> vector<16x326xf32>
    %40 = vector.shape_cast %36 : vector<1x326xi1> to vector<1x326xi1>
    %41 = vector.broadcast %40 : vector<1x326xi1> to vector<16x326xi1>
    %42 = arith.select %41, %39, %34 : vector<16x326xi1>, vector<16x326xf32>
    %c17_i32_8 = arith.constant 17 : i32
    %43 = vector.broadcast %c17_i32_8 : i32 to vector<1x326xi32>
    %44 = arith.cmpi eq, %1, %43 : vector<1x326xi32>
    %45 = vector.extract_strided_slice %42 {offsets = [0, 0], sizes = [16, 18], strides = [1, 1]} : vector<16x326xf32> to vector<16x18xf32>
    %46 = vector.extract_strided_slice %42 {offsets = [0, 0], sizes = [16, 308], strides = [1, 1]} : vector<16x326xf32> to vector<16x308xf32>
    %47 = tpu.concatenate %45, %46 in 1 : vector<16x18xf32>, vector<16x308xf32> -> vector<16x326xf32>
    %48 = vector.shape_cast %44 : vector<1x326xi1> to vector<1x326xi1>
    %49 = vector.broadcast %48 : vector<1x326xi1> to vector<16x326xi1>
    %50 = arith.select %49, %47, %42 : vector<16x326xi1>, vector<16x326xf32>
    %51 = vector.extract_strided_slice %50 {offsets = [0, 0], sizes = [16, 288], strides = [1, 1]} : vector<16x326xf32> to vector<16x288xf32>
    %52 = vector.extract_strided_slice %50 {offsets = [0, 1], sizes = [16, 288], strides = [1, 1]} : vector<16x326xf32> to vector<16x288xf32>
    %53 = vector.extract_strided_slice %50 {offsets = [0, 2], sizes = [16, 288], strides = [1, 1]} : vector<16x326xf32> to vector<16x288xf32>
    %54 = vector.extract_strided_slice %50 {offsets = [0, 18], sizes = [16, 288], strides = [1, 1]} : vector<16x326xf32> to vector<16x288xf32>
    %55 = vector.extract_strided_slice %50 {offsets = [0, 19], sizes = [16, 288], strides = [1, 1]} : vector<16x326xf32> to vector<16x288xf32>
    %56 = vector.extract_strided_slice %50 {offsets = [0, 20], sizes = [16, 288], strides = [1, 1]} : vector<16x326xf32> to vector<16x288xf32>
    %57 = vector.extract_strided_slice %50 {offsets = [0, 36], sizes = [16, 288], strides = [1, 1]} : vector<16x326xf32> to vector<16x288xf32>
    %58 = vector.extract_strided_slice %50 {offsets = [0, 37], sizes = [16, 288], strides = [1, 1]} : vector<16x326xf32> to vector<16x288xf32>
    %59 = vector.extract_strided_slice %50 {offsets = [0, 38], sizes = [16, 288], strides = [1, 1]} : vector<16x326xf32> to vector<16x288xf32>
    %60 = tpu.concatenate %51, %52, %53, %54, %55, %56, %57, %58, %59 in 0 : vector<16x288xf32>, vector<16x288xf32>, vector<16x288xf32>, vector<16x288xf32>, vector<16x288xf32>, vector<16x288xf32>, vector<16x288xf32>, vector<16x288xf32>, vector<16x288xf32> -> vector<144x288xf32>
    %c0_9 = arith.constant 0 : index
    %c0_10 = arith.constant 0 : index
    %61 = vector.load %arg4[%c0_9, %c0_10] : memref<16x144xf32, #tpu.memory_space<vmem>>, vector<16x144xf32>
    %cst_11 = arith.constant dense<0.000000e+00> : vector<16x288xf32>
    %62 = tpu.matmul %61, %60, %cst_11 {dimension_numbers = #tpu.dot_dimension_numbers<[1], [0], [0], [1], [0, 0, 1, 1], [], []>} : vector<16x144xf32>, vector<144x288xf32>, vector<16x288xf32> -> vector<16x288xf32>
    %cst_12 = arith.constant 0.000000e+00 : f32
    %63 = vector.broadcast %cst_12 : f32 to vector<16x288xf32>
    %64 = arith.subf %63, %62 : vector<16x288xf32>
    %65 = math.exp %64 : vector<16x288xf32>
    %cst_13 = arith.constant 1.000000e+00 : f32
    %66 = vector.broadcast %cst_13 : f32 to vector<16x288xf32>
    %67 = arith.addf %66, %65 : vector<16x288xf32>
    %68 = tpu.reciprocal %67 {approx = true} : vector<16x288xf32> -> vector<16x288xf32>
    %69 = vector.extract_strided_slice %50 {offsets = [0, 0], sizes = [16, 288], strides = [1, 1]} : vector<16x326xf32> to vector<16x288xf32>
    %70 = vector.extract_strided_slice %50 {offsets = [0, 1], sizes = [16, 288], strides = [1, 1]} : vector<16x326xf32> to vector<16x288xf32>
    %71 = vector.extract_strided_slice %50 {offsets = [0, 2], sizes = [16, 288], strides = [1, 1]} : vector<16x326xf32> to vector<16x288xf32>
    %72 = vector.extract_strided_slice %50 {offsets = [0, 18], sizes = [16, 288], strides = [1, 1]} : vector<16x326xf32> to vector<16x288xf32>
    %73 = vector.extract_strided_slice %50 {offsets = [0, 19], sizes = [16, 288], strides = [1, 1]} : vector<16x326xf32> to vector<16x288xf32>
    %74 = vector.extract_strided_slice %50 {offsets = [0, 20], sizes = [16, 288], strides = [1, 1]} : vector<16x326xf32> to vector<16x288xf32>
    %75 = vector.extract_strided_slice %50 {offsets = [0, 36], sizes = [16, 288], strides = [1, 1]} : vector<16x326xf32> to vector<16x288xf32>
    %76 = vector.extract_strided_slice %50 {offsets = [0, 37], sizes = [16, 288], strides = [1, 1]} : vector<16x326xf32> to vector<16x288xf32>
    %77 = vector.extract_strided_slice %50 {offsets = [0, 38], sizes = [16, 288], strides = [1, 1]} : vector<16x326xf32> to vector<16x288xf32>
    %78 = tpu.concatenate %69, %70, %71, %72, %73, %74, %75, %76, %77 in 0 : vector<16x288xf32>, vector<16x288xf32>, vector<16x288xf32>, vector<16x288xf32>, vector<16x288xf32>, vector<16x288xf32>, vector<16x288xf32>, vector<16x288xf32>, vector<16x288xf32> -> vector<144x288xf32>
    %c0_14 = arith.constant 0 : index
    %c0_15 = arith.constant 0 : index
    %79 = vector.load %arg5[%c0_14, %c0_15] : memref<16x144xf32, #tpu.memory_space<vmem>>, vector<16x144xf32>
    %cst_16 = arith.constant dense<0.000000e+00> : vector<16x288xf32>
    %80 = tpu.matmul %79, %78, %cst_16 {dimension_numbers = #tpu.dot_dimension_numbers<[1], [0], [0], [1], [0, 0, 1, 1], [], []>} : vector<16x144xf32>, vector<144x288xf32>, vector<16x288xf32> -> vector<16x288xf32>
    %81 = arith.mulf %80, %68 : vector<16x288xf32>
    %cst_17 = arith.constant 0.000000e+00 : f32
    %82 = vector.broadcast %cst_17 : f32 to vector<16x19xf32>
    %83 = tpu.concatenate %82, %81, %82 in 1 : vector<16x19xf32>, vector<16x288xf32>, vector<16x19xf32> -> vector<16x326xf32>
    %c0_i32_18 = arith.constant 0 : i32
    %84 = vector.broadcast %c0_i32_18 : i32 to vector<1x326xi32>
    %85 = arith.cmpi eq, %2, %84 : vector<1x326xi32>
    %86 = vector.extract_strided_slice %83 {offsets = [0, 1], sizes = [16, 325], strides = [1, 1]} : vector<16x326xf32> to vector<16x325xf32>
    %87 = vector.extract_strided_slice %83 {offsets = [0, 325], sizes = [16, 1], strides = [1, 1]} : vector<16x326xf32> to vector<16x1xf32>
    %88 = tpu.concatenate %86, %87 in 1 : vector<16x325xf32>, vector<16x1xf32> -> vector<16x326xf32>
    %89 = vector.shape_cast %85 : vector<1x326xi1> to vector<1x326xi1>
    %90 = vector.broadcast %89 : vector<1x326xi1> to vector<16x326xi1>
    %91 = arith.select %90, %88, %83 : vector<16x326xi1>, vector<16x326xf32>
    %c17_i32_19 = arith.constant 17 : i32
    %92 = vector.broadcast %c17_i32_19 : i32 to vector<1x326xi32>
    %93 = arith.cmpi eq, %2, %92 : vector<1x326xi32>
    %94 = vector.extract_strided_slice %91 {offsets = [0, 0], sizes = [16, 1], strides = [1, 1]} : vector<16x326xf32> to vector<16x1xf32>
    %95 = vector.extract_strided_slice %91 {offsets = [0, 0], sizes = [16, 325], strides = [1, 1]} : vector<16x326xf32> to vector<16x325xf32>
    %96 = tpu.concatenate %94, %95 in 1 : vector<16x1xf32>, vector<16x325xf32> -> vector<16x326xf32>
    %97 = vector.shape_cast %93 : vector<1x326xi1> to vector<1x326xi1>
    %98 = vector.broadcast %97 : vector<1x326xi1> to vector<16x326xi1>
    %99 = arith.select %98, %96, %91 : vector<16x326xi1>, vector<16x326xf32>
    %c0_i32_20 = arith.constant 0 : i32
    %100 = vector.broadcast %c0_i32_20 : i32 to vector<1x326xi32>
    %101 = arith.cmpi eq, %1, %100 : vector<1x326xi32>
    %102 = vector.extract_strided_slice %99 {offsets = [0, 18], sizes = [16, 308], strides = [1, 1]} : vector<16x326xf32> to vector<16x308xf32>
    %103 = vector.extract_strided_slice %99 {offsets = [0, 308], sizes = [16, 18], strides = [1, 1]} : vector<16x326xf32> to vector<16x18xf32>
    %104 = tpu.concatenate %102, %103 in 1 : vector<16x308xf32>, vector<16x18xf32> -> vector<16x326xf32>
    %105 = vector.shape_cast %101 : vector<1x326xi1> to vector<1x326xi1>
    %106 = vector.broadcast %105 : vector<1x326xi1> to vector<16x326xi1>
    %107 = arith.select %106, %104, %99 : vector<16x326xi1>, vector<16x326xf32>
    %c17_i32_21 = arith.constant 17 : i32
    %108 = vector.broadcast %c17_i32_21 : i32 to vector<1x326xi32>
    %109 = arith.cmpi eq, %1, %108 : vector<1x326xi32>
    %110 = vector.extract_strided_slice %107 {offsets = [0, 0], sizes = [16, 18], strides = [1, 1]} : vector<16x326xf32> to vector<16x18xf32>
    %111 = vector.extract_strided_slice %107 {offsets = [0, 0], sizes = [16, 308], strides = [1, 1]} : vector<16x326xf32> to vector<16x308xf32>
    %112 = tpu.concatenate %110, %111 in 1 : vector<16x18xf32>, vector<16x308xf32> -> vector<16x326xf32>
    %113 = vector.shape_cast %109 : vector<1x326xi1> to vector<1x326xi1>
    %114 = vector.broadcast %113 : vector<1x326xi1> to vector<16x326xi1>
    %115 = arith.select %114, %112, %107 : vector<16x326xi1>, vector<16x326xf32>
    %116 = vector.extract_strided_slice %115 {offsets = [0, 0], sizes = [16, 288], strides = [1, 1]} : vector<16x326xf32> to vector<16x288xf32>
    %117 = vector.extract_strided_slice %115 {offsets = [0, 1], sizes = [16, 288], strides = [1, 1]} : vector<16x326xf32> to vector<16x288xf32>
    %118 = vector.extract_strided_slice %115 {offsets = [0, 2], sizes = [16, 288], strides = [1, 1]} : vector<16x326xf32> to vector<16x288xf32>
    %119 = vector.extract_strided_slice %115 {offsets = [0, 18], sizes = [16, 288], strides = [1, 1]} : vector<16x326xf32> to vector<16x288xf32>
    %120 = vector.extract_strided_slice %115 {offsets = [0, 19], sizes = [16, 288], strides = [1, 1]} : vector<16x326xf32> to vector<16x288xf32>
    %121 = vector.extract_strided_slice %115 {offsets = [0, 20], sizes = [16, 288], strides = [1, 1]} : vector<16x326xf32> to vector<16x288xf32>
    %122 = vector.extract_strided_slice %115 {offsets = [0, 36], sizes = [16, 288], strides = [1, 1]} : vector<16x326xf32> to vector<16x288xf32>
    %123 = vector.extract_strided_slice %115 {offsets = [0, 37], sizes = [16, 288], strides = [1, 1]} : vector<16x326xf32> to vector<16x288xf32>
    %124 = vector.extract_strided_slice %115 {offsets = [0, 38], sizes = [16, 288], strides = [1, 1]} : vector<16x326xf32> to vector<16x288xf32>
    %125 = tpu.concatenate %116, %117, %118, %119, %120, %121, %122, %123, %124 in 0 : vector<16x288xf32>, vector<16x288xf32>, vector<16x288xf32>, vector<16x288xf32>, vector<16x288xf32>, vector<16x288xf32>, vector<16x288xf32>, vector<16x288xf32>, vector<16x288xf32> -> vector<144x288xf32>
    %c0_22 = arith.constant 0 : index
    %c0_23 = arith.constant 0 : index
    %126 = vector.load %arg6[%c0_22, %c0_23] : memref<16x144xf32, #tpu.memory_space<vmem>>, vector<16x144xf32>
    %cst_24 = arith.constant dense<0.000000e+00> : vector<16x288xf32>
    %127 = tpu.matmul %126, %125, %cst_24 {dimension_numbers = #tpu.dot_dimension_numbers<[1], [0], [0], [1], [0, 0, 1, 1], [], []>} : vector<16x144xf32>, vector<144x288xf32>, vector<16x288xf32> -> vector<16x288xf32>
    %c0_25 = arith.constant 0 : index
    %c0_26 = arith.constant 0 : index
    %c0_27 = arith.constant 0 : index
    %128 = vector.load %arg7[%c0_25, %c0_26, %c0_27] : memref<1x16x288xf32, #tpu.memory_space<vmem>>, vector<1x16x288xf32>
    %129 = vector.shape_cast %128 : vector<1x16x288xf32> to vector<16x288xf32>
    %130 = vector.shape_cast %127 : vector<16x288xf32> to vector<1x16x288xf32>
    tpu.vector_store %arg7[%c0_25, %c0_26, %c0_27], %130 {strides = array<i32>} : memref<1x16x288xf32, #tpu.memory_space<vmem>>, vector<1x16x288xf32>,
    return
  }
  func.func @transform_0(%arg0: i32) -> (i32, i32, i32) {
    %c0_i32 = arith.constant 0 : i32
    %c0_i32_0 = arith.constant 0 : i32
    %c0_i32_1 = arith.constant 0 : i32
    return %arg0, %c0_i32, %c0_i32_0 : i32, i32, i32
  }
  func.func @transform_1(%arg0: i32) -> (i32, i32) {
    %c0_i32 = arith.constant 0 : i32
    %c0_i32_0 = arith.constant 0 : i32
    %c0_i32_1 = arith.constant 0 : i32
    return %c0_i32, %c0_i32_0 : i32, i32
  }
  func.func @transform_2(%arg0: i32) -> (i32, i32) {
    %c0_i32 = arith.constant 0 : i32
    %c0_i32_0 = arith.constant 0 : i32
    %c0_i32_1 = arith.constant 0 : i32
    return %c0_i32, %c0_i32_0 : i32, i32
  }
  func.func @transform_3(%arg0: i32) -> (i32, i32) {
    %c0_i32 = arith.constant 0 : i32
    %c0_i32_0 = arith.constant 0 : i32
    %c0_i32_1 = arith.constant 0 : i32
    return %c0_i32, %c0_i32_0 : i32, i32
  }
  func.func @transform_4(%arg0: i32) -> (i32, i32) {
    %c0_i32 = arith.constant 0 : i32
    %c0_i32_0 = arith.constant 0 : i32
    %c0_i32_1 = arith.constant 0 : i32
    return %c0_i32, %c0_i32_0 : i32, i32
  }
  func.func @transform_5(%arg0: i32) -> (i32, i32) {
    %c0_i32 = arith.constant 0 : i32
    %c0_i32_0 = arith.constant 0 : i32
    %c0_i32_1 = arith.constant 0 : i32
    return %c0_i32, %c0_i32_0 : i32, i32
  }
  func.func @transform_6(%arg0: i32) -> (i32, i32, i32) {
    %c0_i32 = arith.constant 0 : i32
    %c0_i32_0 = arith.constant 0 : i32
    %c0_i32_1 = arith.constant 0 : i32
    return %arg0, %c0_i32, %c0_i32_0 : i32, i32, i32
  }
}

</mosaic_0001>

<llo_original>
// kernel: tpu_custom_call.1
$region0: #{tpu_custom_call.1}
  #allocation0 [shape = 'u32[]', space=smem, size = 0x4, offset = 0x4, fixed_abs, tag = 'smem constant byte address 0x4 - core index']
  #allocation1 [shape = 'u32[144,128]{1,0:T(1,128)}', space=vmem, size = 0x12000, scoped, tag = 'internal scratch']
  %s0 = inlined_call_operand.hbm [shape: f32[2,16,326], index: 0, kind: input, shape index: {}]
  %s1 = inlined_call_operand.hbm [shape: s32[2,326], index: 1, kind: input, shape index: {}]
  %s2 = inlined_call_operand.hbm [shape: f32[16,144], index: 2, kind: input, shape index: {}]
  %s3 = inlined_call_operand.hbm [shape: f32[16,144], index: 3, kind: input, shape index: {}]
  %s4 = inlined_call_operand.hbm [shape: f32[16,144], index: 4, kind: input, shape index: {}]
  %s5 = inlined_call_operand.hbm [shape: f32[16,144], index: 5, kind: input, shape index: {}]
  %s6 = inlined_call_operand.hbm [shape: f32[2,16,288], index: 6, kind: output, shape index: {}]
  %s7 = sld [smem:[#allocation0]]
  $region81: #{tpu_custom_call.1} parent=0
    _
  %s9 = ssub.s32 1, %s7
  %s10 = scalar_select 0, %s9, %s7
  $region1: #{tpu_custom_call.1} parent=0
    #allocation2 [shape = 'u8[49152]{0}', space=vmem, size = 0xc000, scoped, tag = 'input window, operand 0']
    #allocation3 [shape = 's32[2]{0}', space=sflag, size = 0x8, scoped, tag = 'scoped memory for tpu_custom_call.1']
    #allocation4 [shape = 's32[2]{0}', space=sflag, size = 0x8, scoped, tag = 'scoped memory for tpu_custom_call.1']
    #allocation5 [shape = 'u8[3072]{0}', space=vmem, size = 0xc00, scoped, tag = 'input window, operand 1, single buffered']
    #allocation6 [shape = 's32[1]{0}', space=sflag, size = 0x4, scoped, tag = 'scoped memory for tpu_custom_call.1']
    #allocation7 [shape = 'u8[16384]{0}', space=vmem, size = 0x4000, scoped, tag = 'input window, operand 2, single buffered']
    #allocation8 [shape = 'u8[16384]{0}', space=vmem, size = 0x4000, scoped, tag = 'input window, operand 3, single buffered']
    #allocation9 [shape = 's32[1]{0}', space=sflag, size = 0x4, scoped, tag = 'scoped memory for tpu_custom_call.1']
    #allocation10 [shape = 'u8[16384]{0}', space=vmem, size = 0x4000, scoped, tag = 'input window, operand 4, single buffered']
    #allocation11 [shape = 'u8[16384]{0}', space=vmem, size = 0x4000, scoped, tag = 'input window, operand 5, single buffered']
    #allocation12 [shape = 's32[1]{0}', space=sflag, size = 0x4, scoped, tag = 'scoped memory for tpu_custom_call.1']
    #allocation13 [shape = 'u8[49152]{0}', space=vmem, size = 0xc000, scoped, tag = 'output window, operand 0']
    %11 = vsyncpa [#allocation3], 0
    %s12 = scalar_lea.sflag [#allocation3], 1
    %13 = vsyncpa %s12, 0
    %14 = vsyncpa [#allocation6], 0
    %15 = vsyncpa [#allocation9], 0
    %16 = vsyncpa [#allocation12], 0
    %17 = vsyncpa [#allocation4], 0
    %s18 = scalar_lea.sflag [#allocation4], 1
    %19 = vsyncpa %s18, 0
    loop: start=0, step=1, limit=4
    $region2: #{tpu_custom_call.1} parent=1 // loop_pre_header
      _
    $region3: #{tpu_custom_call.1} parent=1 // loop_header
      %s21 = sphi 0, %s25
      %p22 = scmp.ge.s32.totalorder %s21, 4
      %s31 = sphi 0, %s33
      %s34 = sphi 0, %s31
      %s35 = sphi 0, %s34
      %s51 = sphi 0, %s35
      %s55 = sphi 0, %s55
      %s57 = sphi 0, %s55
      %s58 = sphi 0, %s57
      %s72 = sphi 0, %s58
      %s76 = sphi 0, %s76
      %s78 = sphi 0, %s76
      %s79 = sphi 0, %s78
      %s93 = sphi 0, %s79
      %s97 = sphi 0, %s97
      %s99 = sphi 0, %s97
      %s100 = sphi 0, %s99
      %s114 = sphi 0, %s100
      %s118 = sphi 0, %s118
      %s120 = sphi 0, %s118
      %s121 = sphi 0, %s120
      %s135 = sphi 0, %s121
      %s139 = sphi 0, %s139
      %s141 = sphi 0, %s139
      %s142 = sphi 0, %s141
      %s156 = sphi 0, %s142
      %s162 = sphi 0, %s164
      %s165 = sphi 0, %s162
      %s166 = sphi 0, %s165
      %s182 = sphi 0, %s166
    $region4: #{tpu_custom_call.1} parent=1 // loop_header_branch
      %24 = sbr.rel (%p22) target = $region8
    $region5: #{tpu_custom_call.1} parent=1 // loop_body
      %s26 = ssub.s32 %s21, 1
      %s27 = ssub.s32 %s21, 2
      %s28 = sadd.s32 %s21, 1
      %s29 = ssub.s32 %s21, %s28
      %p30 = scmp.eq.s32.totalorder %s29, 0
      %s32 = sadd.s32 %s31, 1
      %s33 = scalar_select %p30, %s31, %s32
      %p36 = pneg %p30
      %p37 = scmp.eq.s32.totalorder %s21, 1
      %p38 = por %p36, %p37
      %p39 = scmp.ne.s32.totalorder %s31, %s34
      %p40 = scmp.eq.s32.totalorder %s21, 0
      %p41 = por %p39, %p40
      %p42 = scmp.ne.s32.totalorder %s31, %s34
      %p43 = scmp.eq.s32.totalorder %s26, 1
      %p44 = por %p42, %p43
      %p45 = scmp.ne.s32.totalorder %s34, %s35
      %p46 = scmp.eq.s32.totalorder %s26, 0
      %p47 = por %p45, %p46
      %p48 = scmp.ne.s32.totalorder %s34, %s35
      %p49 = scmp.eq.s32.totalorder %s27, 1
      %p50 = por %p48, %p49
      %p52 = scmp.ne.s32.totalorder %s35, %s51
      %p53 = scmp.eq.s32.totalorder %s27, 0
      %p54 = por %p52, %p53
      %s56 = sadd.s32 %s55, 1
      %p59 = scmp.eq.s32.totalorder %s21, 1
      %p60 = scmp.ne.s32.totalorder %s55, %s57
      %p61 = scmp.eq.s32.totalorder %s21, 0
      %p62 = por %p60, %p61
      %p63 = scmp.ne.s32.totalorder %s55, %s57
      %p64 = scmp.eq.s32.totalorder %s26, 1
      %p65 = por %p63, %p64
      %p66 = scmp.ne.s32.totalorder %s57, %s58
      %p67 = scmp.eq.s32.totalorder %s26, 0
      %p68 = por %p66, %p67
      %p69 = scmp.ne.s32.totalorder %s57, %s58
      %p70 = scmp.eq.s32.totalorder %s27, 1
      %p71 = por %p69, %p70
      %p73 = scmp.ne.s32.totalorder %s58, %s72
      %p74 = scmp.eq.s32.totalorder %s27, 0
      %p75 = por %p73, %p74
      %s77 = sadd.s32 %s76, 1
      %p80 = scmp.eq.s32.totalorder %s21, 1
      %p81 = scmp.ne.s32.totalorder %s76, %s78
      %p82 = scmp.eq.s32.totalorder %s21, 0
      %p83 = por %p81, %p82
      %p84 = scmp.ne.s32.totalorder %s76, %s78
      %p85 = scmp.eq.s32.totalorder %s26, 1
      %p86 = por %p84, %p85
      %p87 = scmp.ne.s32.totalorder %s78, %s79
      %p88 = scmp.eq.s32.totalorder %s26, 0
      %p89 = por %p87, %p88
      %p90 = scmp.ne.s32.totalorder %s78, %s79
      %p91 = scmp.eq.s32.totalorder %s27, 1
      %p92 = por %p90, %p91
      %p94 = scmp.ne.s32.totalorder %s79, %s93
      %p95 = scmp.eq.s32.totalorder %s27, 0
      %p96 = por %p94, %p95
      %s98 = sadd.s32 %s97, 1
      %p101 = scmp.eq.s32.totalorder %s21, 1
      %p102 = scmp.ne.s32.totalorder %s97, %s99
      %p103 = scmp.eq.s32.totalorder %s21, 0
      %p104 = por %p102, %p103
      %p105 = scmp.ne.s32.totalorder %s97, %s99
      %p106 = scmp.eq.s32.totalorder %s26, 1
      %p107 = por %p105, %p106
      %p108 = scmp.ne.s32.totalorder %s99, %s100
      %p109 = scmp.eq.s32.totalorder %s26, 0
      %p110 = por %p108, %p109
      %p111 = scmp.ne.s32.totalorder %s99, %s100
      %p112 = scmp.eq.s32.totalorder %s27, 1
      %p113 = por %p111, %p112
      %p115 = scmp.ne.s32.totalorder %s100, %s114
      %p116 = scmp.eq.s32.totalorder %s27, 0
      %p117 = por %p115, %p116
      %s119 = sadd.s32 %s118, 1
      %p122 = scmp.eq.s32.totalorder %s21, 1
      %p123 = scmp.ne.s32.totalorder %s118, %s120
      %p124 = scmp.eq.s32.totalorder %s21, 0
      %p125 = por %p123, %p124
      %p126 = scmp.ne.s32.totalorder %s118, %s120
      %p127 = scmp.eq.s32.totalorder %s26, 1
      %p128 = por %p126, %p127
      %p129 = scmp.ne.s32.totalorder %s120, %s121
      %p130 = scmp.eq.s32.totalorder %s26, 0
      %p131 = por %p129, %p130
      %p132 = scmp.ne.s32.totalorder %s120, %s121
      %p133 = scmp.eq.s32.totalorder %s27, 1
      %p134 = por %p132, %p133
      %p136 = scmp.ne.s32.totalorder %s121, %s135
      %p137 = scmp.eq.s32.totalorder %s27, 0
      %p138 = por %p136, %p137
      %s140 = sadd.s32 %s139, 1
      %p143 = scmp.eq.s32.totalorder %s21, 1
      %p144 = scmp.ne.s32.totalorder %s139, %s141
      %p145 = scmp.eq.s32.totalorder %s21, 0
      %p146 = por %p144, %p145
      %p147 = scmp.ne.s32.totalorder %s139, %s141
      %p148 = scmp.eq.s32.totalorder %s26, 1
      %p149 = por %p147, %p148
      %p150 = scmp.ne.s32.totalorder %s141, %s142
      %p151 = scmp.eq.s32.totalorder %s26, 0
      %p152 = por %p150, %p151
      %p153 = scmp.ne.s32.totalorder %s141, %s142
      %p154 = scmp.eq.s32.totalorder %s27, 1
      %p155 = por %p153, %p154
      %p157 = scmp.ne.s32.totalorder %s142, %s156
      %p158 = scmp.eq.s32.totalorder %s27, 0
      %p159 = por %p157, %p158
      %s160 = ssub.s32 %s21, %s28
      %p161 = scmp.eq.s32.totalorder %s160, 0
      %s163 = sadd.s32 %s162, 1
      %s164 = scalar_select %p161, %s162, %s163
      %p167 = pneg %p161
      %p168 = scmp.eq.s32.totalorder %s21, 1
      %p169 = por %p167, %p168
      %p170 = scmp.ne.s32.totalorder %s162, %s165
      %p171 = scmp.eq.s32.totalorder %s21, 0
      %p172 = por %p170, %p171
      %p173 = scmp.ne.s32.totalorder %s162, %s165
      %p174 = scmp.eq.s32.totalorder %s26, 1
      %p175 = por %p173, %p174
      %p176 = scmp.ne.s32.totalorder %s165, %s166
      %p177 = scmp.eq.s32.totalorder %s26, 0
      %p178 = por %p176, %p177
      %p179 = scmp.ne.s32.totalorder %s165, %s166
      %p180 = scmp.eq.s32.totalorder %s27, 1
      %p181 = por %p179, %p180
      %p183 = scmp.ne.s32.totalorder %s166, %s182
      %p184 = scmp.eq.s32.totalorder %s27, 0
      %p185 = por %p183, %p184
      %p186 = scmp.le.s32.totalorder 1, %s21
      %p187 = scmp.lt.s32.totalorder %s21, 3
      %p188 = pnand %p186, %p187
      %p189 = pneg %p188
      // Predicated region
      $region9: #{tpu_custom_call.1} parent=5 // pred_check
        _
      $region10: #{tpu_custom_call.1} parent=5 // pred_check_branch
        %191 = sbr.rel (%p188) target = $region12
      $region11: #{tpu_custom_call.1} parent=5 // pred_region
        %s192 = ssub.s32 %s21, 1
        // Predicated region
        $region13: #{tpu_custom_call.1} parent=11 // pred_check
          %p193 = pneg %p68
        $region14: #{tpu_custom_call.1} parent=11 // pred_check_branch
          %195 = sbr.rel (%p193) target = $region16
        $region15: #{tpu_custom_call.1} parent=11 // pred_region
          %s197 = ssub.s32 96, 96
          %198 = vsyncadd [#allocation6], %s197
          %s200 = sshll.u32 [#allocation5], 4
          %s201 = int_to_ptr.vmem [resolvable:$true] %s200
          %203 = dma.hbm_to_vmem [thread:$0]  %s1, 96, %s201, [#allocation6]
        $region16: #{tpu_custom_call.1} parent=11 // pred_fallthru
          _
        // Predicated region
        $region17: #{tpu_custom_call.1} parent=11 // pred_check
          %p204 = pneg %p89
        $region18: #{tpu_custom_call.1} parent=11 // pred_check_branch
          %206 = sbr.rel (%p204) target = $region20
        $region19: #{tpu_custom_call.1} parent=11 // pred_region
          %s208 = ssub.s32 512, 512
          %209 = vsyncadd [#allocation6], %s208
          %s210 = sshll.u32 [#allocation7], 4
          %s211 = int_to_ptr.vmem [resolvable:$true] %s210
          %216 = dma.hbm_to_vmem [thread:$0]  %s2, 512, %s211, [#allocation6], 256, 256, 16
        $region20: #{tpu_custom_call.1} parent=11 // pred_fallthru
          _
        // Predicated region
        $region21: #{tpu_custom_call.1} parent=11 // pred_check
          %p217 = pneg %p110
        $region22: #{tpu_custom_call.1} parent=11 // pred_check_branch
          %219 = sbr.rel (%p217) target = $region24
        $region23: #{tpu_custom_call.1} parent=11 // pred_region
          %s221 = ssub.s32 512, 512
          %222 = vsyncadd [#allocation9], %s221
          %s223 = sshll.u32 [#allocation8], 4
          %s224 = int_to_ptr.vmem [resolvable:$true] %s223
          %229 = dma.hbm_to_vmem [thread:$0]  %s3, 512, %s224, [#allocation9], 256, 256, 16
        $region24: #{tpu_custom_call.1} parent=11 // pred_fallthru
          _
        // Predicated region
        $region25: #{tpu_custom_call.1} parent=11 // pred_check
          %p230 = pneg %p131
        $region26: #{tpu_custom_call.1} parent=11 // pred_check_branch
          %232 = sbr.rel (%p230) target = $region28
        $region27: #{tpu_custom_call.1} parent=11 // pred_region
          %s234 = ssub.s32 512, 512
          %235 = vsyncadd [#allocation9], %s234
          %s236 = sshll.u32 [#allocation10], 4
          %s237 = int_to_ptr.vmem [resolvable:$true] %s236
          %242 = dma.hbm_to_vmem [thread:$0]  %s4, 512, %s237, [#allocation9], 256, 256, 16
        $region28: #{tpu_custom_call.1} parent=11 // pred_fallthru
          _
        // Predicated region
        $region29: #{tpu_custom_call.1} parent=11 // pred_check
          %p243 = pneg %p152
        $region30: #{tpu_custom_call.1} parent=11 // pred_check_branch
          %245 = sbr.rel (%p243) target = $region32
        $region31: #{tpu_custom_call.1} parent=11 // pred_region
          %s247 = ssub.s32 512, 512
          %248 = vsyncadd [#allocation12], %s247
          %s249 = sshll.u32 [#allocation11], 4
          %s250 = int_to_ptr.vmem [resolvable:$true] %s249
          %255 = dma.hbm_to_vmem [thread:$0]  %s5, 512, %s250, [#allocation12], 256, 256, 16
        $region32: #{tpu_custom_call.1} parent=11 // pred_fallthru
          _
      $region12: #{tpu_custom_call.1} parent=5 // pred_fallthru
        _
      %p256 = scmp.lt.s32.totalorder %s21, 2
      // Predicated region
      $region33: #{tpu_custom_call.1} parent=5 // pred_check
        %p257 = pneg %p256
      $region34: #{tpu_custom_call.1} parent=5 // pred_check_branch
        %259 = sbr.rel (%p257) target = $region36
      $region35: #{tpu_custom_call.1} parent=5 // pred_region
        // Predicated region
        $region37: #{tpu_custom_call.1} parent=35 // pred_check
          %p260 = pneg %p41
        $region38: #{tpu_custom_call.1} parent=35 // pred_check_branch
          %262 = sbr.rel (%p260) target = $region40
        $region39: #{tpu_custom_call.1} parent=35 // pred_region
          %s263 = sand.u32 %s31, 1
          %s264 = scalar_lea.sflag [#allocation3], %s263
          %s265 = sand.u32 %s31, 1
          %s266 = smul.addr %s265, 48
          %s267 = scalar_lea.vmem [#allocation2], %s266
          %s269 = ssub.s32 768, 768
          %270 = vsyncadd %s264, %s269
          %s271 = smul.addr %s21, 6
          %s272 = smul.addr %s271, 128
          %s273 = scalar_lea.hbm %s0, %s272
          %s274 = sshll.u32 %s267, 4
          %s275 = int_to_ptr.vmem [resolvable:$true] %s274
          %280 = dma.hbm_to_vmem [thread:$0]  %s273, 768, %s275, %s264, 384, 384, 24
        $region40: #{tpu_custom_call.1} parent=35 // pred_fallthru
          _
      $region36: #{tpu_custom_call.1} parent=5 // pred_fallthru
        _
      %p281 = scmp.le.s32.totalorder 1, %s21
      %p282 = scmp.lt.s32.totalorder %s21, 3
      %p283 = pnand %p281, %p282
      %p284 = pneg %p283
      // Predicated region
      $region41: #{tpu_custom_call.1} parent=5 // pred_check
        _
      $region42: #{tpu_custom_call.1} parent=5 // pred_check_branch
        %286 = sbr.rel (%p283) target = $region44
      $region43: #{tpu_custom_call.1} parent=5 // pred_region
        %s287 = ssub.s32 %s21, 1
        %s288 = sand.u32 %s34, 1
        %s289 = scalar_lea.sflag [#allocation3], %s288
        %s290 = sand.u32 %s34, 1
        %s291 = smul.addr %s290, 48
        %s292 = scalar_lea.vmem [#allocation2], %s291
        // Predicated region
        $region45: #{tpu_custom_call.1} parent=43 // pred_check
          %p293 = pneg %p47
        $region46: #{tpu_custom_call.1} parent=43 // pred_check_branch
          %295 = sbr.rel (%p293) target = $region48
        $region47: #{tpu_custom_call.1} parent=43 // pred_region
          %296 = dma.done %s289, 768
        $region48: #{tpu_custom_call.1} parent=43 // pred_fallthru
          _
        // Predicated region
        $region49: #{tpu_custom_call.1} parent=43 // pred_check
          %p297 = pneg %p68
        $region50: #{tpu_custom_call.1} parent=43 // pred_check_branch
          %299 = sbr.rel (%p297) target = $region52
        $region51: #{tpu_custom_call.1} parent=43 // pred_region
          %300 = dma.done [#allocation6], 96
        $region52: #{tpu_custom_call.1} parent=43 // pred_fallthru
          _
        // Predicated region
        $region53: #{tpu_custom_call.1} parent=43 // pred_check
          %p301 = pneg %p89
        $region54: #{tpu_custom_call.1} parent=43 // pred_check_branch
          %303 = sbr.rel (%p301) target = $region56
        $region55: #{tpu_custom_call.1} parent=43 // pred_region
          %304 = dma.done [#allocation6], 512
        $region56: #{tpu_custom_call.1} parent=43 // pred_fallthru
          _
        // Predicated region
        $region57: #{tpu_custom_call.1} parent=43 // pred_check
          %p305 = pneg %p110
        $region58: #{tpu_custom_call.1} parent=43 // pred_check_branch
          %307 = sbr.rel (%p305) target = $region60
        $region59: #{tpu_custom_call.1} parent=43 // pred_region
          %308 = dma.done [#allocation9], 512
        $region60: #{tpu_custom_call.1} parent=43 // pred_fallthru
          _
        // Predicated region
        $region61: #{tpu_custom_call.1} parent=43 // pred_check
          %p309 = pneg %p131
        $region62: #{tpu_custom_call.1} parent=43 // pred_check_branch
          %311 = sbr.rel (%p309) target = $region64
        $region63: #{tpu_custom_call.1} parent=43 // pred_region
          %312 = dma.done [#allocation9], 512
        $region64: #{tpu_custom_call.1} parent=43 // pred_fallthru
          _
        // Predicated region
        $region65: #{tpu_custom_call.1} parent=43 // pred_check
          %p313 = pneg %p152
        $region66: #{tpu_custom_call.1} parent=43 // pred_check_branch
          %315 = sbr.rel (%p313) target = $region68
        $region67: #{tpu_custom_call.1} parent=43 // pred_region
          %316 = dma.done [#allocation12], 512
        $region68: #{tpu_custom_call.1} parent=43 // pred_fallthru
          _
        %s317 = sand.u32 %s34, 1
        %s318 = scalar_lea.sflag [#allocation3], %s317
        %s319 = sand.u32 %s34, 1
        %s320 = smul.addr %s319, 48
        %s321 = scalar_lea.vmem [#allocation2], %s320
        %p322 = pneg %p47
        %p323 = pneg %p44
        %p324 = pneg %p68
        %p325 = pneg %p65
        %p326 = pneg %p89
        %p327 = pneg %p86
        %p328 = pneg %p110
        %p329 = pneg %p107
        %p330 = pneg %p131
        %p331 = pneg %p128
        %p332 = pneg %p152
        %p333 = pneg %p149
        %p334 = pneg %p178
        %p335 = pneg %p175
        %s336 = sand.u32 %s165, 1
        %s337 = scalar_lea.sflag [#allocation4], %s336
        %s338 = sand.u32 %s165, 1
        %s339 = smul.addr %s338, 48
        %s340 = scalar_lea.vmem [#allocation13], %s339
        %v341 = vld [vmem:[#allocation5] sm:$0x3f]
        %v342 = vld [vmem:[%s292] sm:$0xff]
        %v343 = vld [vmem:[%s292 + $0x8] sm:$0xff]
        %v344 = vld [vmem:[%s292 + $0x10] sm:$0xff]
        %v345 = vld [vmem:[%s292 + $0x18] sm:$0xff]
        %v346 = vld [vmem:[%s292 + $0x20] sm:$0xff]
        %v347 = vld [vmem:[%s292 + $0x28] sm:$0xff]
        %354 = vrot.lane.b32.xlu0 %v342, 127
        %v355 = vpop.permute.xlu0 %354
        %356 = vrot.lane.b32.xlu0 %v343, 127
        %v357 = vpop.permute.xlu0 %356
        %358 = vrot.lane.b32.xlu0 %v344, 127
        %v359 = vpop.permute.xlu0 %358
        %360 = vrot.lane.b32.xlu0 %v345, 127
        %v361 = vpop.permute.xlu0 %360
        %362 = vrot.lane.b32.xlu0 %v346, 127
        %v363 = vpop.permute.xlu0 %362
        %364 = vrot.lane.b32.xlu0 %v347, 127
        %v365 = vpop.permute.xlu0 %364
        %vm366 = vcmask 1039360
        %v367 = vsel %vm366, %v355, %v357
        %v368 = vsel %vm366, %v357, %v359
        %v369 = vsel %vm366, %v361, %v363
        %v370 = vsel %vm366, %v363, %v365
        %377 = vrot.lane.b32.xlu0 %v342, 126
        %v378 = vpop.permute.xlu0 %377
        %379 = vrot.lane.b32.xlu0 %v343, 126
        %v380 = vpop.permute.xlu0 %379
        %381 = vrot.lane.b32.xlu0 %v344, 126
        %v382 = vpop.permute.xlu0 %381
        %383 = vrot.lane.b32.xlu0 %v345, 126
        %v384 = vpop.permute.xlu0 %383
        %385 = vrot.lane.b32.xlu0 %v346, 126
        %v386 = vpop.permute.xlu0 %385
        %387 = vrot.lane.b32.xlu0 %v347, 126
        %v388 = vpop.permute.xlu0 %387
        %vm389 = vcmask 1031168
        %v390 = vsel %vm389, %v378, %v380
        %v391 = vsel %vm389, %v380, %v382
        %v392 = vsel %vm389, %v384, %v386
        %v393 = vsel %vm389, %v386, %v388
        %400 = vrot.lane.b32.xlu0 %v342, 110
        %v401 = vpop.permute.xlu0 %400
        %402 = vrot.lane.b32.xlu0 %v343, 110
        %v403 = vpop.permute.xlu0 %402
        %404 = vrot.lane.b32.xlu0 %v344, 110
        %v405 = vpop.permute.xlu0 %404
        %406 = vrot.lane.b32.xlu0 %v345, 110
        %v407 = vpop.permute.xlu0 %406
        %408 = vrot.lane.b32.xlu0 %v346, 110
        %v409 = vpop.permute.xlu0 %408
        %410 = vrot.lane.b32.xlu0 %v347, 110
        %v411 = vpop.permute.xlu0 %410
        %vm412 = vcmask 900096
        %v413 = vsel %vm412, %v401, %v403
        %v414 = vsel %vm412, %v403, %v405
        %v415 = vsel %vm412, %v407, %v409
        %v416 = vsel %vm412, %v409, %v411
        %423 = vrot.lane.b32.xlu0 %v342, 109
        %v424 = vpop.permute.xlu0 %423
        %425 = vrot.lane.b32.xlu0 %v343, 109
        %v426 = vpop.permute.xlu0 %425
        %427 = vrot.lane.b32.xlu0 %v344, 109
        %v428 = vpop.permute.xlu0 %427
        %429 = vrot.lane.b32.xlu0 %v345, 109
        %v430 = vpop.permute.xlu0 %429
        %431 = vrot.lane.b32.xlu0 %v346, 109
        %v432 = vpop.permute.xlu0 %431
        %433 = vrot.lane.b32.xlu0 %v347, 109
        %v434 = vpop.permute.xlu0 %433
        %vm435 = vcmask 891904
        %v436 = vsel %vm435, %v424, %v426
        %v437 = vsel %vm435, %v426, %v428
        %v438 = vsel %vm435, %v430, %v432
        %v439 = vsel %vm435, %v432, %v434
        %446 = vrot.lane.b32.xlu0 %v342, 108
        %v447 = vpop.permute.xlu0 %446
        %448 = vrot.lane.b32.xlu0 %v343, 108
        %v449 = vpop.permute.xlu0 %448
        %450 = vrot.lane.b32.xlu0 %v344, 108
        %v451 = vpop.permute.xlu0 %450
        %452 = vrot.lane.b32.xlu0 %v345, 108
        %v453 = vpop.permute.xlu0 %452
        %454 = vrot.lane.b32.xlu0 %v346, 108
        %v455 = vpop.permute.xlu0 %454
        %456 = vrot.lane.b32.xlu0 %v347, 108
        %v457 = vpop.permute.xlu0 %456
        %vm458 = vcmask 883712
        %v459 = vsel %vm458, %v447, %v449
        %v460 = vsel %vm458, %v449, %v451
        %v461 = vsel %vm458, %v453, %v455
        %v462 = vsel %vm458, %v455, %v457
        %469 = vrot.lane.b32.xlu0 %v342, 92
        %v470 = vpop.permute.xlu0 %469
        %471 = vrot.lane.b32.xlu0 %v343, 92
        %v472 = vpop.permute.xlu0 %471
        %473 = vrot.lane.b32.xlu0 %v344, 92
        %v474 = vpop.permute.xlu0 %473
        %475 = vrot.lane.b32.xlu0 %v345, 92
        %v476 = vpop.permute.xlu0 %475
        %477 = vrot.lane.b32.xlu0 %v346, 92
        %v478 = vpop.permute.xlu0 %477
        %479 = vrot.lane.b32.xlu0 %v347, 92
        %v480 = vpop.permute.xlu0 %479
        %vm481 = vcmask 752640
        %v482 = vsel %vm481, %v470, %v472
        %v483 = vsel %vm481, %v472, %v474
        %v484 = vsel %vm481, %v476, %v478
        %v485 = vsel %vm481, %v478, %v480
        %492 = vrot.lane.b32.xlu0 %v342, 91
        %v493 = vpop.permute.xlu0 %492
        %494 = vrot.lane.b32.xlu0 %v343, 91
        %v495 = vpop.permute.xlu0 %494
        %496 = vrot.lane.b32.xlu0 %v344, 91
        %v497 = vpop.permute.xlu0 %496
        %498 = vrot.lane.b32.xlu0 %v345, 91
        %v499 = vpop.permute.xlu0 %498
        %500 = vrot.lane.b32.xlu0 %v346, 91
        %v501 = vpop.permute.xlu0 %500
        %502 = vrot.lane.b32.xlu0 %v347, 91
        %v503 = vpop.permute.xlu0 %502
        %vm504 = vcmask 744448
        %v505 = vsel %vm504, %v493, %v495
        %v506 = vsel %vm504, %v495, %v497
        %v507 = vsel %vm504, %v499, %v501
        %v508 = vsel %vm504, %v501, %v503
        %515 = vrot.lane.b32.xlu0 %v342, 90
        %v516 = vpop.permute.xlu0 %515
        %517 = vrot.lane.b32.xlu0 %v343, 90
        %v518 = vpop.permute.xlu0 %517
        %519 = vrot.lane.b32.xlu0 %v344, 90
        %v520 = vpop.permute.xlu0 %519
        %521 = vrot.lane.b32.xlu0 %v345, 90
        %v522 = vpop.permute.xlu0 %521
        %523 = vrot.lane.b32.xlu0 %v346, 90
        %v524 = vpop.permute.xlu0 %523
        %525 = vrot.lane.b32.xlu0 %v347, 90
        %v526 = vpop.permute.xlu0 %525
        %vm527 = vcmask 736256
        %v528 = vsel %vm527, %v516, %v518
        %v529 = vsel %vm527, %v518, %v520
        %v530 = vsel %vm527, %v522, %v524
        %v531 = vsel %vm527, %v524, %v526
        %v538 = vld [vmem:[#allocation7] sm:$0xff]
        %v539 = vld [vmem:[#allocation7 + $0x8] sm:$0xff]
        %v540 = vld [vmem:[#allocation7 + $0x10] sm:$0xff]
        %v541 = vld [vmem:[#allocation7 + $0x18] sm:$0xff]
        %vm542 = vcmask 130048
        %v544 = vsel %vm542, %v539, 0
        %v547 = vsel %vm542, %v541, 0
        %549 = vmatprep.subr.mxu0 %v343
        %550 = vmatpush1.msra.mxu0 %v342
        %551 = vmatprep.subr.mxu0 %v346
        %552 = vmatpush1.msra.mxu0 %v345
        %553 = vmatprep.subr.mxu0 %v368
        %554 = vmatpush1.msra.mxu0 %v367
        %555 = vmatprep.subr.mxu0 %v370
        %556 = vmatpush1.msra.mxu0 %v369
        %557 = vmatprep.subr.mxu0 %v391
        %558 = vmatpush1.msra.mxu0 %v390
        %559 = vmatprep.subr.mxu0 %v393
        %560 = vmatpush1.msra.mxu0 %v392
        %561 = vmatprep.subr.mxu0 %v414
        %562 = vmatpush1.msra.mxu0 %v413
        %563 = vmatprep.subr.mxu0 %v416
        %564 = vmatpush1.msra.mxu0 %v415
        %565 = vmatprep.subr.mxu0 %v437
        %566 = vmatpush1.msra.mxu0 %v436
        %567 = vmatprep.subr.mxu0 %v439
        %568 = vmatpush1.msra.mxu0 %v438
        %569 = vmatprep.subr.mxu0 %v460
        %570 = vmatpush1.msra.mxu0 %v459
        %571 = vmatprep.subr.mxu0 %v462
        %572 = vmatpush1.msra.mxu0 %v461
        %573 = vmatprep.subr.mxu0 %v483
        %574 = vmatpush1.msra.mxu0 %v482
        %575 = vmatprep.subr.mxu0 %v485
        %576 = vmatpush1.msra.mxu0 %v484
        %577 = vmatprep.subr.mxu0 %v506
        %578 = vmatpush1.msra.mxu0 %v505
        %579 = vmatprep.subr.mxu0 %v508
        %580 = vmatpush1.msra.mxu0 %v507
        %581 = vmatprep.subr.mxu0 %v529
        %582 = vmatpush1.msra.mxu0 %v528
        %583 = vmatprep.subr.mxu0 %v531
        %584 = vmatpush1.msra.mxu0 %v530
        %585 = vmatprep.subr.mxu0 0.0
        %586 = vmatpush1.msra.mxu0 0.0
        %587 = vmatprep.subr.mxu0 0.0
        %588 = vmatpush1.msra.mxu0 0.0
        %589 = vmatprep.subr.mxu0 0.0
        %590 = vmatpush1.msra.mxu0 0.0
        %591 = vmatprep.subr.mxu0 0.0
        %592 = vmatpush1.msra.mxu0 0.0
        %593 = vmatprep.subr.mxu0 0.0
        %594 = vmatpush1.msra.mxu0 0.0
        %595 = vmatprep.subr.mxu0 0.0
        %596 = vmatpush1.msra.mxu0 0.0
        %597 = vmatprep.subr.mxu0 0.0
        %598 = vmatpush1.msra.mxu0 0.0
        %599 = vmatprep.subr.mxu0 0.0
        %600 = vmatpush1.msra.mxu0 0.0
        %601 = vmatprep.subr.mxu0 0.0
        %602 = vmatpush1.msra.mxu0 0.0
        %603 = vmatprep.subr.mxu0 0.0
        %604 = vmatpush1.msra.mxu0 0.0
        %605 = vmatprep.subr.mxu0 0.0
        %606 = vmatpush1.msra.mxu0 0.0
        %607 = vmatprep.subr.mxu0 0.0
        %608 = vmatpush1.msra.mxu0 0.0
        %609 = vmatprep.subr.mxu0 0.0
        %610 = vmatpush1.msra.mxu0 0.0
        %611 = vmatprep.subr.mxu0 0.0
        %612 = vmatpush1.msra.mxu0 0.0
        %613 = vmatprep.mubr.f32.mxu0 %v544
        %614 = vmatmul.mubr.f32.gmra.mrb[0].mxu0 %v538
        %v615 = vpop.f32.mrb[0].mxu0
        %v616 = vadd.f32 0.0, %v615
        %v617 = vpop.f32.mrb[0].mxu0
        %v618 = vadd.f32 0.0, %v617
        %619 = vmatprep.mubr.f32.mxu0 %v547
        %620 = vmatmul.mubr.f32.gmra.mrb[0].mxu0 %v540
        %v621 = vpop.f32.mrb[0].mxu0
        %v622 = vadd.f32 0.0, %v621
        %v623 = vpop.f32.mrb[0].mxu0
        %v624 = vadd.f32 0.0, %v623
        %625 = vdwg.mxu0
        %626 = vmatprep.subr.mxu0 0.0
        %627 = vmatpush1.msra.mxu0 %v344
        %628 = vmatprep.subr.mxu0 0.0
        %629 = vmatpush1.msra.mxu0 %v347
        %630 = vmatprep.subr.mxu0 0.0
        %631 = vmatpush1.msra.mxu0 %v359
        %632 = vmatprep.subr.mxu0 0.0
        %633 = vmatpush1.msra.mxu0 %v365
        %634 = vmatprep.subr.mxu0 0.0
        %635 = vmatpush1.msra.mxu0 %v382
        %636 = vmatprep.subr.mxu0 0.0
        %637 = vmatpush1.msra.mxu0 %v388
        %638 = vmatprep.subr.mxu0 0.0
        %639 = vmatpush1.msra.mxu0 %v405
        %640 = vmatprep.subr.mxu0 0.0
        %641 = vmatpush1.msra.mxu0 %v411
        %642 = vmatprep.subr.mxu0 0.0
        %643 = vmatpush1.msra.mxu0 %v428
        %644 = vmatprep.subr.mxu0 0.0
        %645 = vmatpush1.msra.mxu0 %v434
        %646 = vmatprep.subr.mxu0 0.0
        %647 = vmatpush1.msra.mxu0 %v451
        %648 = vmatprep.subr.mxu0 0.0
        %649 = vmatpush1.msra.mxu0 %v457
        %650 = vmatprep.subr.mxu0 0.0
        %651 = vmatpush1.msra.mxu0 %v474
        %652 = vmatprep.subr.mxu0 0.0
        %653 = vmatpush1.msra.mxu0 %v480
        %654 = vmatprep.subr.mxu0 0.0
        %655 = vmatpush1.msra.mxu0 %v497
        %656 = vmatprep.subr.mxu0 0.0
        %657 = vmatpush1.msra.mxu0 %v503
        %658 = vmatprep.subr.mxu0 0.0
        %659 = vmatpush1.msra.mxu0 %v520
        %660 = vmatprep.subr.mxu0 0.0
        %661 = vmatpush1.msra.mxu0 %v526
        %662 = vmatprep.subr.mxu0 0.0
        %663 = vmatpush1.msra.mxu0 0.0
        %664 = vmatprep.subr.mxu0 0.0
        %665 = vmatpush1.msra.mxu0 0.0
        %666 = vmatprep.subr.mxu0 0.0
        %667 = vmatpush1.msra.mxu0 0.0
        %668 = vmatprep.subr.mxu0 0.0
        %669 = vmatpush1.msra.mxu0 0.0
        %670 = vmatprep.subr.mxu0 0.0
        %671 = vmatpush1.msra.mxu0 0.0
        %672 = vmatprep.subr.mxu0 0.0
        %673 = vmatpush1.msra.mxu0 0.0
        %674 = vmatprep.subr.mxu0 0.0
        %675 = vmatpush1.msra.mxu0 0.0
        %676 = vmatprep.subr.mxu0 0.0
        %677 = vmatpush1.msra.mxu0 0.0
        %678 = vmatprep.subr.mxu0 0.0
        %679 = vmatpush1.msra.mxu0 0.0
        %680 = vmatprep.subr.mxu0 0.0
        %681 = vmatpush1.msra.mxu0 0.0
        %682 = vmatprep.subr.mxu0 0.0
        %683 = vmatpush1.msra.mxu0 0.0
        %684 = vmatprep.subr.mxu0 0.0
        %685 = vmatpush1.msra.mxu0 0.0
        %686 = vmatprep.subr.mxu0 0.0
        %687 = vmatpush1.msra.mxu0 0.0
        %688 = vmatprep.subr.mxu0 0.0
        %689 = vmatpush1.msra.mxu0 0.0
        %690 = vmatprep.mubr.f32.mxu0 %v544
        %691 = vmatmul.mubr.f32.gmra.mrb[0].mxu0 %v538
        %v692 = vpop.f32.mrb[0].mxu0
        %v693 = vadd.f32 0.0, %v692
        %v694 = vpop.f32.mrb[0].mxu0
        %695 = vmatprep.mubr.f32.mxu0 %v547
        %696 = vmatmul.mubr.f32.gmra.mrb[0].mxu0 %v540
        %v697 = vpop.f32.mrb[0].mxu0
        %v698 = vadd.f32 0.0, %v697
        %v699 = vpop.f32.mrb[0].mxu0
        %700 = vdwg.mxu0
        %707 = vrot.lane.b32.xlu0 %v616, 19
        %v708 = vpop.permute.xlu0 %707
        %709 = vrot.lane.b32.xlu0 %v618, 19
        %v710 = vpop.permute.xlu0 %709
        %711 = vrot.lane.b32.xlu0 %v693, 19
        %v712 = vpop.permute.xlu0 %711
        %713 = vrot.lane.b32.xlu0 %v622, 19
        %v714 = vpop.permute.xlu0 %713
        %715 = vrot.lane.b32.xlu0 %v624, 19
        %v716 = vpop.permute.xlu0 %715
        %717 = vrot.lane.b32.xlu0 %v698, 19
        %v718 = vpop.permute.xlu0 %717
        %vm719 = vcmask 154624
        %v720 = vsel %vm719, %v708, %v710
        %v721 = vsel %vm719, %v710, %v712
        %v722 = vsel %vm719, %v714, %v716
        %v723 = vsel %vm719, %v716, %v718
        %v730 = vsel %vm719, 0.0, %v708
        %v731 = vsel %vm719, 0.0, %v714
        %vm732 = vcmask 416768
        %v733 = vsel %vm732, %v721, 0.0
        %v734 = vsel %vm732, %v723, 0.0
        %vm735 = vcmp.eq.s32.totalorder %v341, 0
        %740 = vrot.lane.b32.xlu0 %v730, 127
        %v741 = vpop.permute.xlu0 %740
        %742 = vrot.lane.b32.xlu0 %v720, 127
        %v743 = vpop.permute.xlu0 %742
        %744 = vrot.lane.b32.xlu0 %v733, 127
        %v745 = vpop.permute.xlu0 %744
        %746 = vrot.lane.b32.xlu0 %v731, 127
        %v747 = vpop.permute.xlu0 %746
        %748 = vrot.lane.b32.xlu0 %v722, 127
        %v749 = vpop.permute.xlu0 %748
        %750 = vrot.lane.b32.xlu0 %v734, 127
        %v751 = vpop.permute.xlu0 %750
        %v752 = vsel %vm366, %v741, %v743
        %v753 = vsel %vm366, %v743, %v745
        %v754 = vsel %vm366, %v747, %v749
        %v755 = vsel %vm366, %v749, %v751
        %vm762 = vcmask 564224
        %v763 = vsel %vm762, %v745, %v733
        %v764 = vsel %vm762, %v751, %v734
        %v765 = vsel %vm735, 1, 0
        %v766 = vlaneseq
        %v767 = vshrl.u32 %v766, 7
        %v768 = vsub.s32 1, %v767
        %v769 = vrot.slane %v765, %v768
        %v770 = vlaneseq
        %v771 = vshrl.u32 %v770, 7
        %v772 = vsub.s32 3, %v771
        %v773 = vrot.slane %v765, %v772
        %v774 = vlaneseq
        %v775 = vshrl.u32 %v774, 7
        %v776 = vsub.s32 5, %v775
        %v777 = vrot.slane %v765, %v776
        %v778 = vlaneseq
        %v779 = vshrl.u32 %v778, 7
        %v780 = vsub.s32 1, %v779
        %v781 = vrot.slane %v769, %v780
        %v782 = vlaneseq
        %v783 = vshrl.u32 %v782, 7
        %v784 = vsub.s32 1, %v783
        %v785 = vrot.slane %v773, %v784
        %v786 = vlaneseq
        %v787 = vshrl.u32 %v786, 7
        %v788 = vsub.s32 1, %v787
        %v789 = vrot.slane %v777, %v788
        %vm790 = vcmp.eq.s32.totalorder %v781, 1
        %vm791 = vcmp.eq.s32.totalorder %v785, 1
        %vm792 = vcmp.eq.s32.totalorder %v789, 1
        %v793 = vsel %vm790, %v752, %v730
        %v794 = vsel %vm791, %v753, %v720
        %v795 = vsel %vm792, %v763, %v733
        %v796 = vsel %vm790, %v754, %v731
        %v797 = vsel %vm791, %v755, %v722
        %v798 = vsel %vm792, %v764, %v734
        %vm799 = vcmp.eq.s32.totalorder %v341, 17
        %806 = vrot.lane.b32.xlu0 %v793, 1
        %v807 = vpop.permute.xlu0 %806
        %808 = vrot.lane.b32.xlu0 %v794, 1
        %v809 = vpop.permute.xlu0 %808
        %810 = vrot.lane.b32.xlu0 %v795, 1
        %v811 = vpop.permute.xlu0 %810
        %812 = vrot.lane.b32.xlu0 %v796, 1
        %v813 = vpop.permute.xlu0 %812
        %814 = vrot.lane.b32.xlu0 %v797, 1
        %v815 = vpop.permute.xlu0 %814
        %816 = vrot.lane.b32.xlu0 %v798, 1
        %v817 = vpop.permute.xlu0 %816
        %vm818 = vcmask 7168
        %v819 = vsel %vm818, %v807, %v809
        %v820 = vsel %vm818, %v809, %v811
        %v821 = vsel %vm818, %v813, %v815
        %v822 = vsel %vm818, %v815, %v817
        %v829 = vsel %vm818, %v793, %v807
        %v830 = vsel %vm818, %v796, %v813
        %v831 = vsel %vm799, 1, 0
        %v832 = vlaneseq
        %v833 = vshrl.u32 %v832, 7
        %v834 = vsub.s32 1, %v833
        %v835 = vrot.slane %v831, %v834
        %v836 = vlaneseq
        %v837 = vshrl.u32 %v836, 7
        %v838 = vsub.s32 3, %v837
        %v839 = vrot.slane %v831, %v838
        %v840 = vlaneseq
        %v841 = vshrl.u32 %v840, 7
        %v842 = vsub.s32 5, %v841
        %v843 = vrot.slane %v831, %v842
        %v844 = vlaneseq
        %v845 = vshrl.u32 %v844, 7
        %v846 = vsub.s32 1, %v845
        %v847 = vrot.slane %v835, %v846
        %v848 = vlaneseq
        %v849 = vshrl.u32 %v848, 7
        %v850 = vsub.s32 1, %v849
        %v851 = vrot.slane %v839, %v850
        %v852 = vlaneseq
        %v853 = vshrl.u32 %v852, 7
        %v854 = vsub.s32 1, %v853
        %v855 = vrot.slane %v843, %v854
        %vm856 = vcmp.eq.s32.totalorder %v847, 1
        %vm857 = vcmp.eq.s32.totalorder %v851, 1
        %vm858 = vcmp.eq.s32.totalorder %v855, 1
        %v859 = vsel %vm856, %v829, %v793
        %v860 = vsel %vm857, %v819, %v794
        %v861 = vsel %vm858, %v820, %v795
        %v862 = vsel %vm856, %v830, %v796
        %v863 = vsel %vm857, %v821, %v797
        %v864 = vsel %vm858, %v822, %v798
        %871 = vrot.lane.b32.xlu0 %v859, 110
        %v872 = vpop.permute.xlu0 %871
        %873 = vrot.lane.b32.xlu0 %v860, 110
        %v874 = vpop.permute.xlu0 %873
        %875 = vrot.lane.b32.xlu0 %v861, 110
        %v876 = vpop.permute.xlu0 %875
        %877 = vrot.lane.b32.xlu0 %v862, 110
        %v878 = vpop.permute.xlu0 %877
        %879 = vrot.lane.b32.xlu0 %v863, 110
        %v880 = vpop.permute.xlu0 %879
        %881 = vrot.lane.b32.xlu0 %v864, 110
        %v882 = vpop.permute.xlu0 %881
        %v883 = vsel %vm412, %v872, %v874
        %v884 = vsel %vm412, %v874, %v876
        %v885 = vsel %vm412, %v878, %v880
        %v886 = vsel %vm412, %v880, %v882
        %vm893 = vcmask 424960
        %v894 = vsel %vm893, %v876, %v861
        %v895 = vsel %vm893, %v882, %v864
        %v896 = vlaneseq
        %v897 = vshrl.u32 %v896, 7
        %v898 = vsub.s32 0, %v897
        %v899 = vrot.slane %v765, %v898
        %v900 = vlaneseq
        %v901 = vshrl.u32 %v900, 7
        %v902 = vsub.s32 2, %v901
        %v903 = vrot.slane %v765, %v902
        %v904 = vlaneseq
        %v905 = vshrl.u32 %v904, 7
        %v906 = vsub.s32 4, %v905
        %v907 = vrot.slane %v765, %v906
        %v908 = vlaneseq
        %v909 = vshrl.u32 %v908, 7
        %v910 = vsub.s32 0, %v909
        %v911 = vrot.slane %v899, %v910
        %v912 = vlaneseq
        %v913 = vshrl.u32 %v912, 7
        %v914 = vsub.s32 0, %v913
        %v915 = vrot.slane %v903, %v914
        %v916 = vlaneseq
        %v917 = vshrl.u32 %v916, 7
        %v918 = vsub.s32 0, %v917
        %v919 = vrot.slane %v907, %v918
        %vm920 = vcmp.eq.s32.totalorder %v911, 1
        %vm921 = vcmp.eq.s32.totalorder %v915, 1
        %vm922 = vcmp.eq.s32.totalorder %v919, 1
        %v923 = vsel %vm920, %v883, %v859
        %v924 = vsel %vm921, %v884, %v860
        %v925 = vsel %vm922, %v894, %v861
        %v926 = vsel %vm920, %v885, %v862
        %v927 = vsel %vm921, %v886, %v863
        %v928 = vsel %vm922, %v895, %v864
        %935 = vrot.lane.b32.xlu0 %v923, 18
        %v936 = vpop.permute.xlu0 %935
        %937 = vrot.lane.b32.xlu0 %v924, 18
        %v938 = vpop.permute.xlu0 %937
        %939 = vrot.lane.b32.xlu0 %v925, 18
        %v940 = vpop.permute.xlu0 %939
        %941 = vrot.lane.b32.xlu0 %v926, 18
        %v942 = vpop.permute.xlu0 %941
        %943 = vrot.lane.b32.xlu0 %v927, 18
        %v944 = vpop.permute.xlu0 %943
        %945 = vrot.lane.b32.xlu0 %v928, 18
        %v946 = vpop.permute.xlu0 %945
        %vm947 = vcmask 146432
        %v948 = vsel %vm947, %v936, %v938
        %v949 = vsel %vm947, %v938, %v940
        %v950 = vsel %vm947, %v942, %v944
        %v951 = vsel %vm947, %v944, %v946
        %v958 = vsel %vm947, %v923, %v936
        %v959 = vsel %vm947, %v926, %v942
        %v960 = vlaneseq
        %v961 = vshrl.u32 %v960, 7
        %v962 = vsub.s32 0, %v961
        %v963 = vrot.slane %v831, %v962
        %v964 = vlaneseq
        %v965 = vshrl.u32 %v964, 7
        %v966 = vsub.s32 2, %v965
        %v967 = vrot.slane %v831, %v966
        %v968 = vlaneseq
        %v969 = vshrl.u32 %v968, 7
        %v970 = vsub.s32 4, %v969
        %v971 = vrot.slane %v831, %v970
        %v972 = vlaneseq
        %v973 = vshrl.u32 %v972, 7
        %v974 = vsub.s32 0, %v973
        %v975 = vrot.slane %v963, %v974
        %v976 = vlaneseq
        %v977 = vshrl.u32 %v976, 7
        %v978 = vsub.s32 0, %v977
        %v979 = vrot.slane %v967, %v978
        %v980 = vlaneseq
        %v981 = vshrl.u32 %v980, 7
        %v982 = vsub.s32 0, %v981
        %v983 = vrot.slane %v971, %v982
        %vm984 = vcmp.eq.s32.totalorder %v975, 1
        %vm985 = vcmp.eq.s32.totalorder %v979, 1
        %vm986 = vcmp.eq.s32.totalorder %v983, 1
        %v987 = vsel %vm984, %v958, %v923
        %v988 = vsel %vm985, %v948, %v924
        %v989 = vsel %vm986, %v949, %v925
        %v990 = vsel %vm984, %v959, %v926
        %v991 = vsel %vm985, %v950, %v927
        %v992 = vsel %vm986, %v951, %v928
        %999 = vrot.lane.b32.xlu0 %v987, 127
        %v1000 = vpop.permute.xlu0 %999
        %1001 = vrot.lane.b32.xlu0 %v988, 127
        %v1002 = vpop.permute.xlu0 %1001
        %1003 = vrot.lane.b32.xlu0 %v989, 127
        %v1004 = vpop.permute.xlu0 %1003
        %1005 = vrot.lane.b32.xlu0 %v990, 127
        %v1006 = vpop.permute.xlu0 %1005
        %1007 = vrot.lane.b32.xlu0 %v991, 127
        %v1008 = vpop.permute.xlu0 %1007
        %1009 = vrot.lane.b32.xlu0 %v992, 127
        %v1010 = vpop.permute.xlu0 %1009
        %v1011 = vsel %vm366, %v1000, %v1002
        %v1012 = vsel %vm366, %v1002, %v1004
        %v1013 = vsel %vm366, %v1006, %v1008
        %v1014 = vsel %vm366, %v1008, %v1010
        %1021 = vrot.lane.b32.xlu0 %v987, 126
        %v1022 = vpop.permute.xlu0 %1021
        %1023 = vrot.lane.b32.xlu0 %v988, 126
        %v1024 = vpop.permute.xlu0 %1023
        %1025 = vrot.lane.b32.xlu0 %v989, 126
        %v1026 = vpop.permute.xlu0 %1025
        %1027 = vrot.lane.b32.xlu0 %v990, 126
        %v1028 = vpop.permute.xlu0 %1027
        %1029 = vrot.lane.b32.xlu0 %v991, 126
        %v1030 = vpop.permute.xlu0 %1029
        %1031 = vrot.lane.b32.xlu0 %v992, 126
        %v1032 = vpop.permute.xlu0 %1031
        %v1033 = vsel %vm389, %v1022, %v1024
        %v1034 = vsel %vm389, %v1024, %v1026
        %v1035 = vsel %vm389, %v1028, %v1030
        %v1036 = vsel %vm389, %v1030, %v1032
        %1043 = vrot.lane.b32.xlu0 %v987, 110
        %v1044 = vpop.permute.xlu0 %1043
        %1045 = vrot.lane.b32.xlu0 %v988, 110
        %v1046 = vpop.permute.xlu0 %1045
        %1047 = vrot.lane.b32.xlu0 %v989, 110
        %v1048 = vpop.permute.xlu0 %1047
        %1049 = vrot.lane.b32.xlu0 %v990, 110
        %v1050 = vpop.permute.xlu0 %1049
        %1051 = vrot.lane.b32.xlu0 %v991, 110
        %v1052 = vpop.permute.xlu0 %1051
        %1053 = vrot.lane.b32.xlu0 %v992, 110
        %v1054 = vpop.permute.xlu0 %1053
        %v1055 = vsel %vm412, %v1044, %v1046
        %v1056 = vsel %vm412, %v1046, %v1048
        %v1057 = vsel %vm412, %v1050, %v1052
        %v1058 = vsel %vm412, %v1052, %v1054
        %1065 = vrot.lane.b32.xlu0 %v987, 109
        %v1066 = vpop.permute.xlu0 %1065
        %1067 = vrot.lane.b32.xlu0 %v988, 109
        %v1068 = vpop.permute.xlu0 %1067
        %1069 = vrot.lane.b32.xlu0 %v989, 109
        %v1070 = vpop.permute.xlu0 %1069
        %1071 = vrot.lane.b32.xlu0 %v990, 109
        %v1072 = vpop.permute.xlu0 %1071
        %1073 = vrot.lane.b32.xlu0 %v991, 109
        %v1074 = vpop.permute.xlu0 %1073
        %1075 = vrot.lane.b32.xlu0 %v992, 109
        %v1076 = vpop.permute.xlu0 %1075
        %v1077 = vsel %vm435, %v1066, %v1068
        %v1078 = vsel %vm435, %v1068, %v1070
        %v1079 = vsel %vm435, %v1072, %v1074
        %v1080 = vsel %vm435, %v1074, %v1076
        %1087 = vrot.lane.b32.xlu0 %v987, 108
        %v1088 = vpop.permute.xlu0 %1087
        %1089 = vrot.lane.b32.xlu0 %v988, 108
        %v1090 = vpop.permute.xlu0 %1089
        %1091 = vrot.lane.b32.xlu0 %v989, 108
        %v1092 = vpop.permute.xlu0 %1091
        %1093 = vrot.lane.b32.xlu0 %v990, 108
        %v1094 = vpop.permute.xlu0 %1093
        %1095 = vrot.lane.b32.xlu0 %v991, 108
        %v1096 = vpop.permute.xlu0 %1095
        %1097 = vrot.lane.b32.xlu0 %v992, 108
        %v1098 = vpop.permute.xlu0 %1097
        %v1099 = vsel %vm458, %v1088, %v1090
        %v1100 = vsel %vm458, %v1090, %v1092
        %v1101 = vsel %vm458, %v1094, %v1096
        %v1102 = vsel %vm458, %v1096, %v1098
        %1109 = vrot.lane.b32.xlu0 %v987, 92
        %v1110 = vpop.permute.xlu0 %1109
        %1111 = vrot.lane.b32.xlu0 %v988, 92
        %v1112 = vpop.permute.xlu0 %1111
        %1113 = vrot.lane.b32.xlu0 %v989, 92
        %v1114 = vpop.permute.xlu0 %1113
        %1115 = vrot.lane.b32.xlu0 %v990, 92
        %v1116 = vpop.permute.xlu0 %1115
        %1117 = vrot.lane.b32.xlu0 %v991, 92
        %v1118 = vpop.permute.xlu0 %1117
        %1119 = vrot.lane.b32.xlu0 %v992, 92
        %v1120 = vpop.permute.xlu0 %1119
        %v1121 = vsel %vm481, %v1110, %v1112
        %v1122 = vsel %vm481, %v1112, %v1114
        %v1123 = vsel %vm481, %v1116, %v1118
        %v1124 = vsel %vm481, %v1118, %v1120
        %1131 = vrot.lane.b32.xlu0 %v987, 91
        %v1132 = vpop.permute.xlu0 %1131
        %1133 = vrot.lane.b32.xlu0 %v988, 91
        %v1134 = vpop.permute.xlu0 %1133
        %1135 = vrot.lane.b32.xlu0 %v989, 91
        %v1136 = vpop.permute.xlu0 %1135
        %1137 = vrot.lane.b32.xlu0 %v990, 91
        %v1138 = vpop.permute.xlu0 %1137
        %1139 = vrot.lane.b32.xlu0 %v991, 91
        %v1140 = vpop.permute.xlu0 %1139
        %1141 = vrot.lane.b32.xlu0 %v992, 91
        %v1142 = vpop.permute.xlu0 %1141
        %v1143 = vsel %vm504, %v1132, %v1134
        %v1144 = vsel %vm504, %v1134, %v1136
        %v1145 = vsel %vm504, %v1138, %v1140
        %v1146 = vsel %vm504, %v1140, %v1142
        %1153 = vrot.lane.b32.xlu0 %v987, 90
        %v1154 = vpop.permute.xlu0 %1153
        %1155 = vrot.lane.b32.xlu0 %v988, 90
        %v1156 = vpop.permute.xlu0 %1155
        %1157 = vrot.lane.b32.xlu0 %v989, 90
        %v1158 = vpop.permute.xlu0 %1157
        %1159 = vrot.lane.b32.xlu0 %v990, 90
        %v1160 = vpop.permute.xlu0 %1159
        %1161 = vrot.lane.b32.xlu0 %v991, 90
        %v1162 = vpop.permute.xlu0 %1161
        %1163 = vrot.lane.b32.xlu0 %v992, 90
        %v1164 = vpop.permute.xlu0 %1163
        %v1165 = vsel %vm527, %v1154, %v1156
        %v1166 = vsel %vm527, %v1156, %v1158
        %v1167 = vsel %vm527, %v1160, %v1162
        %v1168 = vsel %vm527, %v1162, %v1164
        %v1175 = vld [vmem:[#allocation8] sm:$0xff]
        %v1176 = vld [vmem:[#allocation8 + $0x8] sm:$0xff]
        %v1177 = vld [vmem:[#allocation8 + $0x10] sm:$0xff]
        %v1178 = vld [vmem:[#allocation8 + $0x18] sm:$0xff]
        %v1180 = vsel %vm542, %v1176, 0
        %v1183 = vsel %vm542, %v1178, 0
        %1185 = vmatprep.subr.mxu0 %v988
        %1186 = vmatpush1.msra.mxu0 %v987
        %1187 = vmatprep.subr.mxu0 %v991
        %1188 = vmatpush1.msra.mxu0 %v990
        %1189 = vmatprep.subr.mxu0 %v1012
        %1190 = vmatpush1.msra.mxu0 %v1011
        %1191 = vmatprep.subr.mxu0 %v1014
        %1192 = vmatpush1.msra.mxu0 %v1013
        %1193 = vmatprep.subr.mxu0 %v1034
        %1194 = vmatpush1.msra.mxu0 %v1033
        %1195 = vmatprep.subr.mxu0 %v1036
        %1196 = vmatpush1.msra.mxu0 %v1035
        %1197 = vmatprep.subr.mxu0 %v1056
        %1198 = vmatpush1.msra.mxu0 %v1055
        %1199 = vmatprep.subr.mxu0 %v1058
        %1200 = vmatpush1.msra.mxu0 %v1057
        %1201 = vmatprep.subr.mxu0 %v1078
        %1202 = vmatpush1.msra.mxu0 %v1077
        %1203 = vmatprep.subr.mxu0 %v1080
        %1204 = vmatpush1.msra.mxu0 %v1079
        %1205 = vmatprep.subr.mxu0 %v1100
        %1206 = vmatpush1.msra.mxu0 %v1099
        %1207 = vmatprep.subr.mxu0 %v1102
        %1208 = vmatpush1.msra.mxu0 %v1101
        %1209 = vmatprep.subr.mxu0 %v1122
        %1210 = vmatpush1.msra.mxu0 %v1121
        %1211 = vmatprep.subr.mxu0 %v1124
        %1212 = vmatpush1.msra.mxu0 %v1123
        %1213 = vmatprep.subr.mxu0 %v1144
        %1214 = vmatpush1.msra.mxu0 %v1143
        %1215 = vmatprep.subr.mxu0 %v1146
        %1216 = vmatpush1.msra.mxu0 %v1145
        %1217 = vmatprep.subr.mxu0 %v1166
        %1218 = vmatpush1.msra.mxu0 %v1165
        %1219 = vmatprep.subr.mxu0 %v1168
        %1220 = vmatpush1.msra.mxu0 %v1167
        %1221 = vmatprep.subr.mxu0 0.0
        %1222 = vmatpush1.msra.mxu0 0.0
        %1223 = vmatprep.subr.mxu0 0.0
        %1224 = vmatpush1.msra.mxu0 0.0
        %1225 = vmatprep.subr.mxu0 0.0
        %1226 = vmatpush1.msra.mxu0 0.0
        %1227 = vmatprep.subr.mxu0 0.0
        %1228 = vmatpush1.msra.mxu0 0.0
        %1229 = vmatprep.subr.mxu0 0.0
        %1230 = vmatpush1.msra.mxu0 0.0
        %1231 = vmatprep.subr.mxu0 0.0
        %1232 = vmatpush1.msra.mxu0 0.0
        %1233 = vmatprep.subr.mxu0 0.0
        %1234 = vmatpush1.msra.mxu0 0.0
        %1235 = vmatprep.subr.mxu0 0.0
        %1236 = vmatpush1.msra.mxu0 0.0
        %1237 = vmatprep.subr.mxu0 0.0
        %1238 = vmatpush1.msra.mxu0 0.0
        %1239 = vmatprep.subr.mxu0 0.0
        %1240 = vmatpush1.msra.mxu0 0.0
        %1241 = vmatprep.subr.mxu0 0.0
        %1242 = vmatpush1.msra.mxu0 0.0
        %1243 = vmatprep.subr.mxu0 0.0
        %1244 = vmatpush1.msra.mxu0 0.0
        %1245 = vmatprep.subr.mxu0 0.0
        %1246 = vmatpush1.msra.mxu0 0.0
        %1247 = vmatprep.subr.mxu0 0.0
        %1248 = vmatpush1.msra.mxu0 0.0
        %1249 = vmatprep.mubr.f32.mxu0 %v1180
        %1250 = vmatmul.mubr.f32.gmra.mrb[0].mxu0 %v1175
        %v1251 = vpop.f32.mrb[0].mxu0
        %v1252 = vadd.f32 0.0, %v1251
        %v1253 = vpop.f32.mrb[0].mxu0
        %v1254 = vadd.f32 0.0, %v1253
        %1255 = vmatprep.mubr.f32.mxu0 %v1183
        %1256 = vmatmul.mubr.f32.gmra.mrb[0].mxu0 %v1177
        %v1257 = vpop.f32.mrb[0].mxu0
        %v1258 = vadd.f32 0.0, %v1257
        %v1259 = vpop.f32.mrb[0].mxu0
        %v1260 = vadd.f32 0.0, %v1259
        %1261 = vdwg.mxu0
        %1262 = vmatprep.subr.mxu0 0.0
        %1263 = vmatpush1.msra.mxu0 %v989
        %1264 = vmatprep.subr.mxu0 0.0
        %1265 = vmatpush1.msra.mxu0 %v992
        %1266 = vmatprep.subr.mxu0 0.0
        %1267 = vmatpush1.msra.mxu0 %v1004
        %1268 = vmatprep.subr.mxu0 0.0
        %1269 = vmatpush1.msra.mxu0 %v1010
        %1270 = vmatprep.subr.mxu0 0.0
        %1271 = vmatpush1.msra.mxu0 %v1026
        %1272 = vmatprep.subr.mxu0 0.0
        %1273 = vmatpush1.msra.mxu0 %v1032
        %1274 = vmatprep.subr.mxu0 0.0
        %1275 = vmatpush1.msra.mxu0 %v1048
        %1276 = vmatprep.subr.mxu0 0.0
        %1277 = vmatpush1.msra.mxu0 %v1054
        %1278 = vmatprep.subr.mxu0 0.0
        %1279 = vmatpush1.msra.mxu0 %v1070
        %1280 = vmatprep.subr.mxu0 0.0
        %1281 = vmatpush1.msra.mxu0 %v1076
        %1282 = vmatprep.subr.mxu0 0.0
        %1283 = vmatpush1.msra.mxu0 %v1092
        %1284 = vmatprep.subr.mxu0 0.0
        %1285 = vmatpush1.msra.mxu0 %v1098
        %1286 = vmatprep.subr.mxu0 0.0
        %1287 = vmatpush1.msra.mxu0 %v1114
        %1288 = vmatprep.subr.mxu0 0.0
        %1289 = vmatpush1.msra.mxu0 %v1120
        %1290 = vmatprep.subr.mxu0 0.0
        %1291 = vmatpush1.msra.mxu0 %v1136
        %1292 = vmatprep.subr.mxu0 0.0
        %1293 = vmatpush1.msra.mxu0 %v1142
        %1294 = vmatprep.subr.mxu0 0.0
        %1295 = vmatpush1.msra.mxu0 %v1158
        %1296 = vmatprep.subr.mxu0 0.0
        %1297 = vmatpush1.msra.mxu0 %v1164
        %1298 = vmatprep.subr.mxu0 0.0
        %1299 = vmatpush1.msra.mxu0 0.0
        %1300 = vmatprep.subr.mxu0 0.0
        %1301 = vmatpush1.msra.mxu0 0.0
        %1302 = vmatprep.subr.mxu0 0.0
        %1303 = vmatpush1.msra.mxu0 0.0
        %1304 = vmatprep.subr.mxu0 0.0
        %1305 = vmatpush1.msra.mxu0 0.0
        %1306 = vmatprep.subr.mxu0 0.0
        %1307 = vmatpush1.msra.mxu0 0.0
        %1308 = vmatprep.subr.mxu0 0.0
        %1309 = vmatpush1.msra.mxu0 0.0
        %1310 = vmatprep.subr.mxu0 0.0
        %1311 = vmatpush1.msra.mxu0 0.0
        %1312 = vmatprep.subr.mxu0 0.0
        %1313 = vmatpush1.msra.mxu0 0.0
        %1314 = vmatprep.subr.mxu0 0.0
        %1315 = vmatpush1.msra.mxu0 0.0
        %1316 = vmatprep.subr.mxu0 0.0
        %1317 = vmatpush1.msra.mxu0 0.0
        %1318 = vmatprep.subr.mxu0 0.0
        %1319 = vmatpush1.msra.mxu0 0.0
        %1320 = vmatprep.subr.mxu0 0.0
        %1321 = vmatpush1.msra.mxu0 0.0
        %1322 = vmatprep.subr.mxu0 0.0
        %1323 = vmatpush1.msra.mxu0 0.0
        %1324 = vmatprep.subr.mxu0 0.0
        %1325 = vmatpush1.msra.mxu0 0.0
        %1326 = vmatprep.mubr.f32.mxu0 %v1180
        %1327 = vmatmul.mubr.f32.gmra.mrb[0].mxu0 %v1175
        %v1328 = vpop.f32.mrb[0].mxu0
        %v1329 = vadd.f32 0.0, %v1328
        %v1330 = vpop.f32.mrb[0].mxu0
        %1331 = vmatprep.mubr.f32.mxu0 %v1183
        %1332 = vmatmul.mubr.f32.gmra.mrb[0].mxu0 %v1177
        %v1333 = vpop.f32.mrb[0].mxu0
        %v1334 = vadd.f32 0.0, %v1333
        %v1335 = vpop.f32.mrb[0].mxu0
        %1336 = vdwg.mxu0
        %v1337 = vsub.f32 0.0, %v1252
        %v1338 = vsub.f32 0.0, %v1254
        %v1339 = vsub.f32 0.0, %v1329
        %v1340 = vsub.f32 0.0, %v1258
        %v1341 = vsub.f32 0.0, %v1260
        %v1342 = vsub.f32 0.0, %v1334
        %v1343 = vmul.f32 %v1337, 1.442695
        %v1344 = vpow.pop %v1343
        %v1345 = vmul.f32 %v1338, 1.442695
        %v1346 = vpow.pop %v1345
        %v1347 = vmul.f32 %v1339, 1.442695
        %v1348 = vpow.pop %v1347
        %v1349 = vmul.f32 %v1340, 1.442695
        %v1350 = vpow.pop %v1349
        %v1351 = vmul.f32 %v1341, 1.442695
        %v1352 = vpow.pop %v1351
        %v1353 = vmul.f32 %v1342, 1.442695
        %v1354 = vpow.pop %v1353
        %v1355 = vadd.f32 %v1344, 1.0
        %v1356 = vadd.f32 %v1346, 1.0
        %v1357 = vadd.f32 %v1348, 1.0
        %v1358 = vadd.f32 %v1350, 1.0
        %v1359 = vadd.f32 %v1352, 1.0
        %v1360 = vadd.f32 %v1354, 1.0
        %v1361 = vrcp.pop %v1355
        %v1362 = vrcp.pop %v1356
        %v1363 = vrcp.pop %v1357
        %v1364 = vrcp.pop %v1358
        %v1365 = vrcp.pop %v1359
        %v1366 = vrcp.pop %v1360
        %v1367 = vld [vmem:[#allocation10] sm:$0xff]
        %v1368 = vld [vmem:[#allocation10 + $0x8] sm:$0xff]
        %v1369 = vld [vmem:[#allocation10 + $0x10] sm:$0xff]
        %v1370 = vld [vmem:[#allocation10 + $0x18] sm:$0xff]
        %v1372 = vsel %vm542, %v1368, 0
        %v1375 = vsel %vm542, %v1370, 0
        %1377 = vmatprep.subr.mxu0 %v988
        %1378 = vmatpush1.msra.mxu0 %v987
        %1379 = vmatprep.subr.mxu0 %v991
        %1380 = vmatpush1.msra.mxu0 %v990
        %1381 = vmatprep.subr.mxu0 %v1012
        %1382 = vmatpush1.msra.mxu0 %v1011
        %1383 = vmatprep.subr.mxu0 %v1014
        %1384 = vmatpush1.msra.mxu0 %v1013
        %1385 = vmatprep.subr.mxu0 %v1034
        %1386 = vmatpush1.msra.mxu0 %v1033
        %1387 = vmatprep.subr.mxu0 %v1036
        %1388 = vmatpush1.msra.mxu0 %v1035
        %1389 = vmatprep.subr.mxu0 %v1056
        %1390 = vmatpush1.msra.mxu0 %v1055
        %1391 = vmatprep.subr.mxu0 %v1058
        %1392 = vmatpush1.msra.mxu0 %v1057
        %1393 = vmatprep.subr.mxu0 %v1078
        %1394 = vmatpush1.msra.mxu0 %v1077
        %1395 = vmatprep.subr.mxu0 %v1080
        %1396 = vmatpush1.msra.mxu0 %v1079
        %1397 = vmatprep.subr.mxu0 %v1100
        %1398 = vmatpush1.msra.mxu0 %v1099
        %1399 = vmatprep.subr.mxu0 %v1102
        %1400 = vmatpush1.msra.mxu0 %v1101
        %1401 = vmatprep.subr.mxu0 %v1122
        %1402 = vmatpush1.msra.mxu0 %v1121
        %1403 = vmatprep.subr.mxu0 %v1124
        %1404 = vmatpush1.msra.mxu0 %v1123
        %1405 = vmatprep.subr.mxu0 %v1144
        %1406 = vmatpush1.msra.mxu0 %v1143
        %1407 = vmatprep.subr.mxu0 %v1146
        %1408 = vmatpush1.msra.mxu0 %v1145
        %1409 = vmatprep.subr.mxu0 %v1166
        %1410 = vmatpush1.msra.mxu0 %v1165
        %1411 = vmatprep.subr.mxu0 %v1168
        %1412 = vmatpush1.msra.mxu0 %v1167
        %1413 = vmatprep.subr.mxu0 0.0
        %1414 = vmatpush1.msra.mxu0 0.0
        %1415 = vmatprep.subr.mxu0 0.0
        %1416 = vmatpush1.msra.mxu0 0.0
        %1417 = vmatprep.subr.mxu0 0.0
        %1418 = vmatpush1.msra.mxu0 0.0
        %1419 = vmatprep.subr.mxu0 0.0
        %1420 = vmatpush1.msra.mxu0 0.0
        %1421 = vmatprep.subr.mxu0 0.0
        %1422 = vmatpush1.msra.mxu0 0.0
        %1423 = vmatprep.subr.mxu0 0.0
        %1424 = vmatpush1.msra.mxu0 0.0
        %1425 = vmatprep.subr.mxu0 0.0
        %1426 = vmatpush1.msra.mxu0 0.0
        %1427 = vmatprep.subr.mxu0 0.0
        %1428 = vmatpush1.msra.mxu0 0.0
        %1429 = vmatprep.subr.mxu0 0.0
        %1430 = vmatpush1.msra.mxu0 0.0
        %1431 = vmatprep.subr.mxu0 0.0
        %1432 = vmatpush1.msra.mxu0 0.0
        %1433 = vmatprep.subr.mxu0 0.0
        %1434 = vmatpush1.msra.mxu0 0.0
        %1435 = vmatprep.subr.mxu0 0.0
        %1436 = vmatpush1.msra.mxu0 0.0
        %1437 = vmatprep.subr.mxu0 0.0
        %1438 = vmatpush1.msra.mxu0 0.0
        %1439 = vmatprep.subr.mxu0 0.0
        %1440 = vmatpush1.msra.mxu0 0.0
        %1441 = vmatprep.mubr.f32.mxu0 %v1372
        %1442 = vmatmul.mubr.f32.gmra.mrb[0].mxu0 %v1367
        %v1443 = vpop.f32.mrb[0].mxu0
        %v1444 = vadd.f32 0.0, %v1443
        %v1445 = vpop.f32.mrb[0].mxu0
        %v1446 = vadd.f32 0.0, %v1445
        %1447 = vmatprep.mubr.f32.mxu0 %v1375
        %1448 = vmatmul.mubr.f32.gmra.mrb[0].mxu0 %v1369
        %v1449 = vpop.f32.mrb[0].mxu0
        %v1450 = vadd.f32 0.0, %v1449
        %v1451 = vpop.f32.mrb[0].mxu0
        %v1452 = vadd.f32 0.0, %v1451
        %1453 = vdwg.mxu0
        %1454 = vmatprep.subr.mxu0 0.0
        %1455 = vmatpush1.msra.mxu0 %v989
        %1456 = vmatprep.subr.mxu0 0.0
        %1457 = vmatpush1.msra.mxu0 %v992
        %1458 = vmatprep.subr.mxu0 0.0
        %1459 = vmatpush1.msra.mxu0 %v1004
        %1460 = vmatprep.subr.mxu0 0.0
        %1461 = vmatpush1.msra.mxu0 %v1010
        %1462 = vmatprep.subr.mxu0 0.0
        %1463 = vmatpush1.msra.mxu0 %v1026
        %1464 = vmatprep.subr.mxu0 0.0
        %1465 = vmatpush1.msra.mxu0 %v1032
        %1466 = vmatprep.subr.mxu0 0.0
        %1467 = vmatpush1.msra.mxu0 %v1048
        %1468 = vmatprep.subr.mxu0 0.0
        %1469 = vmatpush1.msra.mxu0 %v1054
        %1470 = vmatprep.subr.mxu0 0.0
        %1471 = vmatpush1.msra.mxu0 %v1070
        %1472 = vmatprep.subr.mxu0 0.0
        %1473 = vmatpush1.msra.mxu0 %v1076
        %1474 = vmatprep.subr.mxu0 0.0
        %1475 = vmatpush1.msra.mxu0 %v1092
        %1476 = vmatprep.subr.mxu0 0.0
        %1477 = vmatpush1.msra.mxu0 %v1098
        %1478 = vmatprep.subr.mxu0 0.0
        %1479 = vmatpush1.msra.mxu0 %v1114
        %1480 = vmatprep.subr.mxu0 0.0
        %1481 = vmatpush1.msra.mxu0 %v1120
        %1482 = vmatprep.subr.mxu0 0.0
        %1483 = vmatpush1.msra.mxu0 %v1136
        %1484 = vmatprep.subr.mxu0 0.0
        %1485 = vmatpush1.msra.mxu0 %v1142
        %1486 = vmatprep.subr.mxu0 0.0
        %1487 = vmatpush1.msra.mxu0 %v1158
        %1488 = vmatprep.subr.mxu0 0.0
        %1489 = vmatpush1.msra.mxu0 %v1164
        %1490 = vmatprep.subr.mxu0 0.0
        %1491 = vmatpush1.msra.mxu0 0.0
        %1492 = vmatprep.subr.mxu0 0.0
        %1493 = vmatpush1.msra.mxu0 0.0
        %1494 = vmatprep.subr.mxu0 0.0
        %1495 = vmatpush1.msra.mxu0 0.0
        %1496 = vmatprep.subr.mxu0 0.0
        %1497 = vmatpush1.msra.mxu0 0.0
        %1498 = vmatprep.subr.mxu0 0.0
        %1499 = vmatpush1.msra.mxu0 0.0
        %1500 = vmatprep.subr.mxu0 0.0
        %1501 = vmatpush1.msra.mxu0 0.0
        %1502 = vmatprep.subr.mxu0 0.0
        %1503 = vmatpush1.msra.mxu0 0.0
        %1504 = vmatprep.subr.mxu0 0.0
        %1505 = vmatpush1.msra.mxu0 0.0
        %1506 = vmatprep.subr.mxu0 0.0
        %1507 = vmatpush1.msra.mxu0 0.0
        %1508 = vmatprep.subr.mxu0 0.0
        %1509 = vmatpush1.msra.mxu0 0.0
        %1510 = vmatprep.subr.mxu0 0.0
        %1511 = vmatpush1.msra.mxu0 0.0
        %1512 = vmatprep.subr.mxu0 0.0
        %1513 = vmatpush1.msra.mxu0 0.0
        %1514 = vmatprep.subr.mxu0 0.0
        %1515 = vmatpush1.msra.mxu0 0.0
        %1516 = vmatprep.subr.mxu0 0.0
        %1517 = vmatpush1.msra.mxu0 0.0
        %1518 = vmatprep.mubr.f32.mxu0 %v1372
        %1519 = vmatmul.mubr.f32.gmra.mrb[0].mxu0 %v1367
        %v1520 = vpop.f32.mrb[0].mxu0
        %v1521 = vadd.f32 0.0, %v1520
        %v1522 = vpop.f32.mrb[0].mxu0
        %1523 = vmatprep.mubr.f32.mxu0 %v1375
        %1524 = vmatmul.mubr.f32.gmra.mrb[0].mxu0 %v1369
        %v1525 = vpop.f32.mrb[0].mxu0
        %v1526 = vadd.f32 0.0, %v1525
        %v1527 = vpop.f32.mrb[0].mxu0
        %1528 = vdwg.mxu0
        %v1529 = vmul.f32 %v1444, %v1361
        %v1530 = vmul.f32 %v1446, %v1362
        %v1531 = vmul.f32 %v1521, %v1363
        %v1532 = vmul.f32 %v1450, %v1364
        %v1533 = vmul.f32 %v1452, %v1365
        %v1534 = vmul.f32 %v1526, %v1366
        %1541 = vrot.lane.b32.xlu0 %v1529, 19
        %v1542 = vpop.permute.xlu0 %1541
        %1543 = vrot.lane.b32.xlu0 %v1530, 19
        %v1544 = vpop.permute.xlu0 %1543
        %1545 = vrot.lane.b32.xlu0 %v1531, 19
        %v1546 = vpop.permute.xlu0 %1545
        %1547 = vrot.lane.b32.xlu0 %v1532, 19
        %v1548 = vpop.permute.xlu0 %1547
        %1549 = vrot.lane.b32.xlu0 %v1533, 19
        %v1550 = vpop.permute.xlu0 %1549
        %1551 = vrot.lane.b32.xlu0 %v1534, 19
        %v1552 = vpop.permute.xlu0 %1551
        %v1553 = vsel %vm719, %v1542, %v1544
        %v1554 = vsel %vm719, %v1544, %v1546
        %v1555 = vsel %vm719, %v1548, %v1550
        %v1556 = vsel %vm719, %v1550, %v1552
        %v1563 = vsel %vm719, 0.0, %v1542
        %v1564 = vsel %vm719, 0.0, %v1548
        %v1565 = vsel %vm732, %v1554, 0.0
        %v1566 = vsel %vm732, %v1556, 0.0
        %1571 = vrot.lane.b32.xlu0 %v1563, 127
        %v1572 = vpop.permute.xlu0 %1571
        %1573 = vrot.lane.b32.xlu0 %v1553, 127
        %v1574 = vpop.permute.xlu0 %1573
        %1575 = vrot.lane.b32.xlu0 %v1565, 127
        %v1576 = vpop.permute.xlu0 %1575
        %1577 = vrot.lane.b32.xlu0 %v1564, 127
        %v1578 = vpop.permute.xlu0 %1577
        %1579 = vrot.lane.b32.xlu0 %v1555, 127
        %v1580 = vpop.permute.xlu0 %1579
        %1581 = vrot.lane.b32.xlu0 %v1566, 127
        %v1582 = vpop.permute.xlu0 %1581
        %v1583 = vsel %vm366, %v1572, %v1574
        %v1584 = vsel %vm366, %v1574, %v1576
        %v1585 = vsel %vm366, %v1578, %v1580
        %v1586 = vsel %vm366, %v1580, %v1582
        %v1593 = vsel %vm762, %v1576, %v1565
        %v1594 = vsel %vm762, %v1582, %v1566
        %v1595 = vsel %vm790, %v1583, %v1563
        %v1596 = vsel %vm791, %v1584, %v1553
        %v1597 = vsel %vm792, %v1593, %v1565
        %v1598 = vsel %vm790, %v1585, %v1564
        %v1599 = vsel %vm791, %v1586, %v1555
        %v1600 = vsel %vm792, %v1594, %v1566
        %1607 = vrot.lane.b32.xlu0 %v1595, 1
        %v1608 = vpop.permute.xlu0 %1607
        %1609 = vrot.lane.b32.xlu0 %v1596, 1
        %v1610 = vpop.permute.xlu0 %1609
        %1611 = vrot.lane.b32.xlu0 %v1597, 1
        %v1612 = vpop.permute.xlu0 %1611
        %1613 = vrot.lane.b32.xlu0 %v1598, 1
        %v1614 = vpop.permute.xlu0 %1613
        %1615 = vrot.lane.b32.xlu0 %v1599, 1
        %v1616 = vpop.permute.xlu0 %1615
        %1617 = vrot.lane.b32.xlu0 %v1600, 1
        %v1618 = vpop.permute.xlu0 %1617
        %v1619 = vsel %vm818, %v1608, %v1610
        %v1620 = vsel %vm818, %v1610, %v1612
        %v1621 = vsel %vm818, %v1614, %v1616
        %v1622 = vsel %vm818, %v1616, %v1618
        %v1629 = vsel %vm818, %v1595, %v1608
        %v1630 = vsel %vm818, %v1598, %v1614
        %v1631 = vsel %vm856, %v1629, %v1595
        %v1632 = vsel %vm857, %v1619, %v1596
        %v1633 = vsel %vm858, %v1620, %v1597
        %v1634 = vsel %vm856, %v1630, %v1598
        %v1635 = vsel %vm857, %v1621, %v1599
        %v1636 = vsel %vm858, %v1622, %v1600
        %1643 = vrot.lane.b32.xlu0 %v1631, 110
        %v1644 = vpop.permute.xlu0 %1643
        %1645 = vrot.lane.b32.xlu0 %v1632, 110
        %v1646 = vpop.permute.xlu0 %1645
        %1647 = vrot.lane.b32.xlu0 %v1633, 110
        %v1648 = vpop.permute.xlu0 %1647
        %1649 = vrot.lane.b32.xlu0 %v1634, 110
        %v1650 = vpop.permute.xlu0 %1649
        %1651 = vrot.lane.b32.xlu0 %v1635, 110
        %v1652 = vpop.permute.xlu0 %1651
        %1653 = vrot.lane.b32.xlu0 %v1636, 110
        %v1654 = vpop.permute.xlu0 %1653
        %v1655 = vsel %vm412, %v1644, %v1646
        %v1656 = vsel %vm412, %v1646, %v1648
        %v1657 = vsel %vm412, %v1650, %v1652
        %v1658 = vsel %vm412, %v1652, %v1654
        %v1665 = vsel %vm893, %v1648, %v1633
        %v1666 = vsel %vm893, %v1654, %v1636
        %v1667 = vsel %vm920, %v1655, %v1631
        %v1668 = vsel %vm921, %v1656, %v1632
        %v1669 = vsel %vm922, %v1665, %v1633
        %v1670 = vsel %vm920, %v1657, %v1634
        %v1671 = vsel %vm921, %v1658, %v1635
        %v1672 = vsel %vm922, %v1666, %v1636
        %1679 = vrot.lane.b32.xlu0 %v1667, 18
        %v1680 = vpop.permute.xlu0 %1679
        %1681 = vrot.lane.b32.xlu0 %v1668, 18
        %v1682 = vpop.permute.xlu0 %1681
        %1683 = vrot.lane.b32.xlu0 %v1669, 18
        %v1684 = vpop.permute.xlu0 %1683
        %1685 = vrot.lane.b32.xlu0 %v1670, 18
        %v1686 = vpop.permute.xlu0 %1685
        %1687 = vrot.lane.b32.xlu0 %v1671, 18
        %v1688 = vpop.permute.xlu0 %1687
        %1689 = vrot.lane.b32.xlu0 %v1672, 18
        %v1690 = vpop.permute.xlu0 %1689
        %v1691 = vsel %vm947, %v1680, %v1682
        %v1692 = vsel %vm947, %v1682, %v1684
        %v1693 = vsel %vm947, %v1686, %v1688
        %v1694 = vsel %vm947, %v1688, %v1690
        %v1701 = vsel %vm947, %v1667, %v1680
        %v1702 = vsel %vm947, %v1670, %v1686
        %v1703 = vsel %vm984, %v1701, %v1667
        %v1704 = vsel %vm985, %v1691, %v1668
        %v1705 = vsel %vm986, %v1692, %v1669
        %v1706 = vsel %vm984, %v1702, %v1670
        %v1707 = vsel %vm985, %v1693, %v1671
        %v1708 = vsel %vm986, %v1694, %v1672
        %1715 = vrot.lane.b32.xlu0 %v1703, 127
        %v1716 = vpop.permute.xlu0 %1715
        %1717 = vrot.lane.b32.xlu0 %v1704, 127
        %v1718 = vpop.permute.xlu0 %1717
        %1719 = vrot.lane.b32.xlu0 %v1705, 127
        %v1720 = vpop.permute.xlu0 %1719
        %1721 = vrot.lane.b32.xlu0 %v1706, 127
        %v1722 = vpop.permute.xlu0 %1721
        %1723 = vrot.lane.b32.xlu0 %v1707, 127
        %v1724 = vpop.permute.xlu0 %1723
        %1725 = vrot.lane.b32.xlu0 %v1708, 127
        %v1726 = vpop.permute.xlu0 %1725
        %v1727 = vsel %vm366, %v1716, %v1718
        %v1728 = vsel %vm366, %v1718, %v1720
        %v1729 = vsel %vm366, %v1722, %v1724
        %v1730 = vsel %vm366, %v1724, %v1726
        %1737 = vrot.lane.b32.xlu0 %v1703, 126
        %v1738 = vpop.permute.xlu0 %1737
        %1739 = vrot.lane.b32.xlu0 %v1704, 126
        %v1740 = vpop.permute.xlu0 %1739
        %1741 = vrot.lane.b32.xlu0 %v1705, 126
        %v1742 = vpop.permute.xlu0 %1741
        %1743 = vrot.lane.b32.xlu0 %v1706, 126
        %v1744 = vpop.permute.xlu0 %1743
        %1745 = vrot.lane.b32.xlu0 %v1707, 126
        %v1746 = vpop.permute.xlu0 %1745
        %1747 = vrot.lane.b32.xlu0 %v1708, 126
        %v1748 = vpop.permute.xlu0 %1747
        %v1749 = vsel %vm389, %v1738, %v1740
        %v1750 = vsel %vm389, %v1740, %v1742
        %v1751 = vsel %vm389, %v1744, %v1746
        %v1752 = vsel %vm389, %v1746, %v1748
        %1759 = vrot.lane.b32.xlu0 %v1703, 110
        %v1760 = vpop.permute.xlu0 %1759
        %1761 = vrot.lane.b32.xlu0 %v1704, 110
        %v1762 = vpop.permute.xlu0 %1761
        %1763 = vrot.lane.b32.xlu0 %v1705, 110
        %v1764 = vpop.permute.xlu0 %1763
        %1765 = vrot.lane.b32.xlu0 %v1706, 110
        %v1766 = vpop.permute.xlu0 %1765
        %1767 = vrot.lane.b32.xlu0 %v1707, 110
        %v1768 = vpop.permute.xlu0 %1767
        %1769 = vrot.lane.b32.xlu0 %v1708, 110
        %v1770 = vpop.permute.xlu0 %1769
        %v1771 = vsel %vm412, %v1760, %v1762
        %v1772 = vsel %vm412, %v1762, %v1764
        %v1773 = vsel %vm412, %v1766, %v1768
        %v1774 = vsel %vm412, %v1768, %v1770
        %1781 = vrot.lane.b32.xlu0 %v1703, 109
        %v1782 = vpop.permute.xlu0 %1781
        %1783 = vrot.lane.b32.xlu0 %v1704, 109
        %v1784 = vpop.permute.xlu0 %1783
        %1785 = vrot.lane.b32.xlu0 %v1705, 109
        %v1786 = vpop.permute.xlu0 %1785
        %1787 = vrot.lane.b32.xlu0 %v1706, 109
        %v1788 = vpop.permute.xlu0 %1787
        %1789 = vrot.lane.b32.xlu0 %v1707, 109
        %v1790 = vpop.permute.xlu0 %1789
        %1791 = vrot.lane.b32.xlu0 %v1708, 109
        %v1792 = vpop.permute.xlu0 %1791
        %v1793 = vsel %vm435, %v1782, %v1784
        %v1794 = vsel %vm435, %v1784, %v1786
        %v1795 = vsel %vm435, %v1788, %v1790
        %v1796 = vsel %vm435, %v1790, %v1792
        %1803 = vrot.lane.b32.xlu0 %v1703, 108
        %v1804 = vpop.permute.xlu0 %1803
        %1805 = vrot.lane.b32.xlu0 %v1704, 108
        %v1806 = vpop.permute.xlu0 %1805
        %1807 = vrot.lane.b32.xlu0 %v1705, 108
        %v1808 = vpop.permute.xlu0 %1807
        %1809 = vrot.lane.b32.xlu0 %v1706, 108
        %v1810 = vpop.permute.xlu0 %1809
        %1811 = vrot.lane.b32.xlu0 %v1707, 108
        %v1812 = vpop.permute.xlu0 %1811
        %1813 = vrot.lane.b32.xlu0 %v1708, 108
        %v1814 = vpop.permute.xlu0 %1813
        %v1815 = vsel %vm458, %v1804, %v1806
        %v1816 = vsel %vm458, %v1806, %v1808
        %v1817 = vsel %vm458, %v1810, %v1812
        %v1818 = vsel %vm458, %v1812, %v1814
        %1825 = vrot.lane.b32.xlu0 %v1703, 92
        %v1826 = vpop.permute.xlu0 %1825
        %1827 = vrot.lane.b32.xlu0 %v1704, 92
        %v1828 = vpop.permute.xlu0 %1827
        %1829 = vrot.lane.b32.xlu0 %v1705, 92
        %v1830 = vpop.permute.xlu0 %1829
        %1831 = vrot.lane.b32.xlu0 %v1706, 92
        %v1832 = vpop.permute.xlu0 %1831
        %1833 = vrot.lane.b32.xlu0 %v1707, 92
        %v1834 = vpop.permute.xlu0 %1833
        %1835 = vrot.lane.b32.xlu0 %v1708, 92
        %v1836 = vpop.permute.xlu0 %1835
        %v1837 = vsel %vm481, %v1826, %v1828
        %v1838 = vsel %vm481, %v1828, %v1830
        %v1839 = vsel %vm481, %v1832, %v1834
        %v1840 = vsel %vm481, %v1834, %v1836
        %1847 = vrot.lane.b32.xlu0 %v1703, 91
        %v1848 = vpop.permute.xlu0 %1847
        %1849 = vrot.lane.b32.xlu0 %v1704, 91
        %v1850 = vpop.permute.xlu0 %1849
        %1851 = vrot.lane.b32.xlu0 %v1705, 91
        %v1852 = vpop.permute.xlu0 %1851
        %1853 = vrot.lane.b32.xlu0 %v1706, 91
        %v1854 = vpop.permute.xlu0 %1853
        %1855 = vrot.lane.b32.xlu0 %v1707, 91
        %v1856 = vpop.permute.xlu0 %1855
        %1857 = vrot.lane.b32.xlu0 %v1708, 91
        %v1858 = vpop.permute.xlu0 %1857
        %v1859 = vsel %vm504, %v1848, %v1850
        %v1860 = vsel %vm504, %v1850, %v1852
        %v1861 = vsel %vm504, %v1854, %v1856
        %v1862 = vsel %vm504, %v1856, %v1858
        %1869 = vrot.lane.b32.xlu0 %v1703, 90
        %v1870 = vpop.permute.xlu0 %1869
        %1871 = vrot.lane.b32.xlu0 %v1704, 90
        %v1872 = vpop.permute.xlu0 %1871
        %1873 = vrot.lane.b32.xlu0 %v1705, 90
        %v1874 = vpop.permute.xlu0 %1873
        %1875 = vrot.lane.b32.xlu0 %v1706, 90
        %v1876 = vpop.permute.xlu0 %1875
        %1877 = vrot.lane.b32.xlu0 %v1707, 90
        %v1878 = vpop.permute.xlu0 %1877
        %1879 = vrot.lane.b32.xlu0 %v1708, 90
        %v1880 = vpop.permute.xlu0 %1879
        %v1881 = vsel %vm527, %v1870, %v1872
        %v1882 = vsel %vm527, %v1872, %v1874
        %v1883 = vsel %vm527, %v1876, %v1878
        %v1884 = vsel %vm527, %v1878, %v1880
        %v1891 = vld [vmem:[#allocation11] sm:$0xff]
        %v1892 = vld [vmem:[#allocation11 + $0x8] sm:$0xff]
        %v1893 = vld [vmem:[#allocation11 + $0x10] sm:$0xff]
        %v1894 = vld [vmem:[#allocation11 + $0x18] sm:$0xff]
        %v1896 = vsel %vm542, %v1892, 0
        %v1899 = vsel %vm542, %v1894, 0
        %1901 = vmatprep.subr.mxu0 %v1704
        %1902 = vmatpush1.msra.mxu0 %v1703
        %1903 = vmatprep.subr.mxu0 %v1707
        %1904 = vmatpush1.msra.mxu0 %v1706
        %1905 = vmatprep.subr.mxu0 %v1728
        %1906 = vmatpush1.msra.mxu0 %v1727
        %1907 = vmatprep.subr.mxu0 %v1730
        %1908 = vmatpush1.msra.mxu0 %v1729
        %1909 = vmatprep.subr.mxu0 %v1750
        %1910 = vmatpush1.msra.mxu0 %v1749
        %1911 = vmatprep.subr.mxu0 %v1752
        %1912 = vmatpush1.msra.mxu0 %v1751
        %1913 = vmatprep.subr.mxu0 %v1772
        %1914 = vmatpush1.msra.mxu0 %v1771
        %1915 = vmatprep.subr.mxu0 %v1774
        %1916 = vmatpush1.msra.mxu0 %v1773
        %1917 = vmatprep.subr.mxu0 %v1794
        %1918 = vmatpush1.msra.mxu0 %v1793
        %1919 = vmatprep.subr.mxu0 %v1796
        %1920 = vmatpush1.msra.mxu0 %v1795
        %1921 = vmatprep.subr.mxu0 %v1816
        %1922 = vmatpush1.msra.mxu0 %v1815
        %1923 = vmatprep.subr.mxu0 %v1818
        %1924 = vmatpush1.msra.mxu0 %v1817
        %1925 = vmatprep.subr.mxu0 %v1838
        %1926 = vmatpush1.msra.mxu0 %v1837
        %1927 = vmatprep.subr.mxu0 %v1840
        %1928 = vmatpush1.msra.mxu0 %v1839
        %1929 = vmatprep.subr.mxu0 %v1860
        %1930 = vmatpush1.msra.mxu0 %v1859
        %1931 = vmatprep.subr.mxu0 %v1862
        %1932 = vmatpush1.msra.mxu0 %v1861
        %1933 = vmatprep.subr.mxu0 %v1882
        %1934 = vmatpush1.msra.mxu0 %v1881
        %1935 = vmatprep.subr.mxu0 %v1884
        %1936 = vmatpush1.msra.mxu0 %v1883
        %1937 = vmatprep.subr.mxu0 0.0
        %1938 = vmatpush1.msra.mxu0 0.0
        %1939 = vmatprep.subr.mxu0 0.0
        %1940 = vmatpush1.msra.mxu0 0.0
        %1941 = vmatprep.subr.mxu0 0.0
        %1942 = vmatpush1.msra.mxu0 0.0
        %1943 = vmatprep.subr.mxu0 0.0
        %1944 = vmatpush1.msra.mxu0 0.0
        %1945 = vmatprep.subr.mxu0 0.0
        %1946 = vmatpush1.msra.mxu0 0.0
        %1947 = vmatprep.subr.mxu0 0.0
        %1948 = vmatpush1.msra.mxu0 0.0
        %1949 = vmatprep.subr.mxu0 0.0
        %1950 = vmatpush1.msra.mxu0 0.0
        %1951 = vmatprep.subr.mxu0 0.0
        %1952 = vmatpush1.msra.mxu0 0.0
        %1953 = vmatprep.subr.mxu0 0.0
        %1954 = vmatpush1.msra.mxu0 0.0
        %1955 = vmatprep.subr.mxu0 0.0
        %1956 = vmatpush1.msra.mxu0 0.0
        %1957 = vmatprep.subr.mxu0 0.0
        %1958 = vmatpush1.msra.mxu0 0.0
        %1959 = vmatprep.subr.mxu0 0.0
        %1960 = vmatpush1.msra.mxu0 0.0
        %1961 = vmatprep.subr.mxu0 0.0
        %1962 = vmatpush1.msra.mxu0 0.0
        %1963 = vmatprep.subr.mxu0 0.0
        %1964 = vmatpush1.msra.mxu0 0.0
        %1965 = vmatprep.mubr.f32.mxu0 %v1896
        %1966 = vmatmul.mubr.f32.gmra.mrb[0].mxu0 %v1891
        %v1967 = vpop.f32.mrb[0].mxu0
        %v1968 = vadd.f32 0.0, %v1967
        %v1969 = vpop.f32.mrb[0].mxu0
        %v1970 = vadd.f32 0.0, %v1969
        %1971 = vmatprep.mubr.f32.mxu0 %v1899
        %1972 = vmatmul.mubr.f32.gmra.mrb[0].mxu0 %v1893
        %v1973 = vpop.f32.mrb[0].mxu0
        %v1974 = vadd.f32 0.0, %v1973
        %v1975 = vpop.f32.mrb[0].mxu0
        %v1976 = vadd.f32 0.0, %v1975
        %1977 = vdwg.mxu0
        %1978 = vmatprep.subr.mxu0 0.0
        %1979 = vmatpush1.msra.mxu0 %v1705
        %1980 = vmatprep.subr.mxu0 0.0
        %1981 = vmatpush1.msra.mxu0 %v1708
        %1982 = vmatprep.subr.mxu0 0.0
        %1983 = vmatpush1.msra.mxu0 %v1720
        %1984 = vmatprep.subr.mxu0 0.0
        %1985 = vmatpush1.msra.mxu0 %v1726
        %1986 = vmatprep.subr.mxu0 0.0
        %1987 = vmatpush1.msra.mxu0 %v1742
        %1988 = vmatprep.subr.mxu0 0.0
        %1989 = vmatpush1.msra.mxu0 %v1748
        %1990 = vmatprep.subr.mxu0 0.0
        %1991 = vmatpush1.msra.mxu0 %v1764
        %1992 = vmatprep.subr.mxu0 0.0
        %1993 = vmatpush1.msra.mxu0 %v1770
        %1994 = vmatprep.subr.mxu0 0.0
        %1995 = vmatpush1.msra.mxu0 %v1786
        %1996 = vmatprep.subr.mxu0 0.0
        %1997 = vmatpush1.msra.mxu0 %v1792
        %1998 = vmatprep.subr.mxu0 0.0
        %1999 = vmatpush1.msra.mxu0 %v1808
        %2000 = vmatprep.subr.mxu0 0.0
        %2001 = vmatpush1.msra.mxu0 %v1814
        %2002 = vmatprep.subr.mxu0 0.0
        %2003 = vmatpush1.msra.mxu0 %v1830
        %2004 = vmatprep.subr.mxu0 0.0
        %2005 = vmatpush1.msra.mxu0 %v1836
        %2006 = vmatprep.subr.mxu0 0.0
        %2007 = vmatpush1.msra.mxu0 %v1852
        %2008 = vmatprep.subr.mxu0 0.0
        %2009 = vmatpush1.msra.mxu0 %v1858
        %2010 = vmatprep.subr.mxu0 0.0
        %2011 = vmatpush1.msra.mxu0 %v1874
        %2012 = vmatprep.subr.mxu0 0.0
        %2013 = vmatpush1.msra.mxu0 %v1880
        %2014 = vmatprep.subr.mxu0 0.0
        %2015 = vmatpush1.msra.mxu0 0.0
        %2016 = vmatprep.subr.mxu0 0.0
        %2017 = vmatpush1.msra.mxu0 0.0
        %2018 = vmatprep.subr.mxu0 0.0
        %2019 = vmatpush1.msra.mxu0 0.0
        %2020 = vmatprep.subr.mxu0 0.0
        %2021 = vmatpush1.msra.mxu0 0.0
        %2022 = vmatprep.subr.mxu0 0.0
        %2023 = vmatpush1.msra.mxu0 0.0
        %2024 = vmatprep.subr.mxu0 0.0
        %2025 = vmatpush1.msra.mxu0 0.0
        %2026 = vmatprep.subr.mxu0 0.0
        %2027 = vmatpush1.msra.mxu0 0.0
        %2028 = vmatprep.subr.mxu0 0.0
        %2029 = vmatpush1.msra.mxu0 0.0
        %2030 = vmatprep.subr.mxu0 0.0
        %2031 = vmatpush1.msra.mxu0 0.0
        %2032 = vmatprep.subr.mxu0 0.0
        %2033 = vmatpush1.msra.mxu0 0.0
        %2034 = vmatprep.subr.mxu0 0.0
        %2035 = vmatpush1.msra.mxu0 0.0
        %2036 = vmatprep.subr.mxu0 0.0
        %2037 = vmatpush1.msra.mxu0 0.0
        %2038 = vmatprep.subr.mxu0 0.0
        %2039 = vmatpush1.msra.mxu0 0.0
        %2040 = vmatprep.subr.mxu0 0.0
        %2041 = vmatpush1.msra.mxu0 0.0
        %2042 = vmatprep.mubr.f32.mxu0 %v1896
        %2043 = vmatmul.mubr.f32.gmra.mrb[0].mxu0 %v1891
        %v2044 = vpop.f32.mrb[0].mxu0
        %v2045 = vadd.f32 0.0, %v2044
        %v2046 = vpop.f32.mrb[0].mxu0
        %2047 = vmatprep.mubr.f32.mxu0 %v1899
        %2048 = vmatmul.mubr.f32.gmra.mrb[0].mxu0 %v1893
        %v2049 = vpop.f32.mrb[0].mxu0
        %v2050 = vadd.f32 0.0, %v2049
        %v2051 = vpop.f32.mrb[0].mxu0
        %2052 = vdwg.mxu0
        %2053 = vst [vmem:[%s340] sm:$0xff] %v1968
        %2054 = vst [vmem:[%s340 + $0x8] sm:$0xff] %v1970
        %vm2055 = vcmask 261120
        %2056 = vst.msk [vmem:[%s340 + $0x10] sm:$0xff] %vm2055, %v2045
        %2057 = vst [vmem:[%s340 + $0x18] sm:$0xff] %v1974
        %2058 = vst [vmem:[%s340 + $0x20] sm:$0xff] %v1976
        %2059 = vst.msk [vmem:[%s340 + $0x28] sm:$0xff] %vm2055, %v2050
        %s2060 = sand.u32 %s165, 1
        %s2061 = scalar_lea.sflag [#allocation4], %s2060
        %s2062 = sand.u32 %s165, 1
        %s2063 = smul.addr %s2062, 48
        %s2064 = scalar_lea.vmem [#allocation13], %s2063
        // Predicated region
        $region69: #{tpu_custom_call.1} parent=43 // pred_check
          %p2065 = pneg %p175
        $region70: #{tpu_custom_call.1} parent=43 // pred_check_branch
          %2067 = sbr.rel (%p2065) target = $region72
        $region71: #{tpu_custom_call.1} parent=43 // pred_region
          %s2069 = ssub.s32 768, 768
          %2070 = vsyncadd %s2061, %s2069
          %s2071 = smul.addr %s26, 6
          %s2072 = smul.addr %s2071, 128
          %s2073 = scalar_lea.hbm %s6, %s2072
          %s2074 = sshll.u32 %s2064, 4
          %s2075 = int_to_ptr.vmem [resolvable:$true] %s2074
          %2080 = dma.vmem_to_hbm [thread:$0]  %s2075, 768, %s2073, %s2061, 384, 384, 24
        $region72: #{tpu_custom_call.1} parent=43 // pred_fallthru
          _
      $region44: #{tpu_custom_call.1} parent=5 // pred_fallthru
        _
      %p2081 = scmp.le.s32.totalorder 2, %s21
      // Predicated region
      $region73: #{tpu_custom_call.1} parent=5 // pred_check
        %p2082 = pneg %p2081
      $region74: #{tpu_custom_call.1} parent=5 // pred_check_branch
        %2084 = sbr.rel (%p2082) target = $region76
      $region75: #{tpu_custom_call.1} parent=5 // pred_region
        %s2085 = ssub.s32 %s21, 2
        // Predicated region
        $region77: #{tpu_custom_call.1} parent=75 // pred_check
          %p2086 = pneg %p181
        $region78: #{tpu_custom_call.1} parent=75 // pred_check_branch
          %2088 = sbr.rel (%p2086) target = $region80
        $region79: #{tpu_custom_call.1} parent=75 // pred_region
          %s2089 = sand.u32 %s166, 1
          %s2090 = scalar_lea.sflag [#allocation4], %s2089
          %s2091 = sand.u32 %s166, 1
          %s2092 = smul.addr %s2091, 48
          %s2093 = scalar_lea.vmem [#allocation13], %s2092
          %2094 = dma.done %s2090, 768
        $region80: #{tpu_custom_call.1} parent=75 // pred_fallthru
          _
      $region76: #{tpu_custom_call.1} parent=5 // pred_fallthru
        _
    $region6: #{tpu_custom_call.1} parent=1 // loop_footer
      %s25 = sadd.s32 1, %s21
    $region7: #{tpu_custom_call.1} parent=1 // loop_footer_branch
      %20 = sbr.rel target = $region3
    $region8: #{tpu_custom_call.1} parent=1 // loop_exit
      _
    %2095 = vsyncpa [#allocation3], 1
    %s2096 = scalar_lea.sflag [#allocation3], 1
    %2097 = vsyncpa %s2096, 1
    %2098 = vsyncpa [#allocation6], 1
    %2099 = vsyncpa [#allocation9], 1
    %2100 = vsyncpa [#allocation12], 1
    %2101 = vsyncpa [#allocation4], 1
    %s2102 = scalar_lea.sflag [#allocation4], 1
    %2103 = vsyncpa %s2102, 1

</llo_original>
